<compile_context>
chip_gen: v7x
topology: tpu7x:2x2x1
jax: 0.10.0
libtpu: 0.0.40
codegen_flags: <defaults>
</compile_context>

<pallas_src>
import jax
import jax.numpy as jnp
import numpy as np
from jax import lax
from jax.experimental import pallas as pl
from jax.experimental.pallas import tpu as pltpu


# --------------------------------------------------------------------------
def _make_kernel(H, W, ch3r, ch5r):
    """Kernel factory.  Operates on (C, L) slabs, L = (#images in block)*H*W."""
    HW = H * W

    def kernel(x_ref, wr_ref, br_ref, w2_ref, b2_ref, out_ref):
        x = x_ref[...]                                 # (Cin, L), lane-dense
        L = x.shape[1]

        # ---- boundary masks: ONE lane iota, one compare per offset ----------
        lane = lax.broadcasted_iota(jnp.int32, (1, L), 1)
        col = lane % W            # column j of the output pixel
        pix = lane % HW           # flat pixel index i*W + j within its image
        col_ok, row_ok = {}, {}
        for d in (1, 2):
            col_ok[d] = col < (W - d)          # j + d <  W
            col_ok[-d] = col >= d              # j - d >= 0
            row_ok[d] = pix < (H - d) * W      # i + d <  H
            row_ok[-d] = pix >= d * W          # i - d >= 0

        # ---- lane shifts (XLU rotations).  pltpu.roll == jnp.roll semantics:
        # roll(v, s, 1)[:, k] == v[:, (k - s) % L], so a shift of -d reads the
        # pixel d positions "ahead" in the flattened (image, row, col) order.
        def shift_cols(v, dj, fill):
            t = pltpu.roll(v, (-dj) % L, 1)    # t[:, k] = v[:, (k + dj) % L]
            return jnp.where(col_ok[dj], t, fill)

        def shift_rows(v, di, fill):
            t = pltpu.roll(v, (-di * W) % L, 1)
            return jnp.where(row_ok[di], t, fill)

        # ---- the two 1x1 reduce convs as one small matmul --------------------
        rr = (jnp.dot(wr_ref[...], x, preferred_element_type=jnp.float32)
              + br_ref[...])
        r3 = rr[0:ch3r, :]
        r5 = rr[ch3r:ch3r + ch5r, :]

        # ---- 3x3 stride-1 max pool (SAME), separable, -inf padding ----------
        ninf = jnp.float32(-jnp.inf)
        hmax = jnp.maximum(jnp.maximum(shift_cols(x, -1, ninf), x),
                           shift_cols(x, 1, ninf))
        pooled = jnp.maximum(jnp.maximum(shift_rows(hmax, -1, ninf), hmax),
                             shift_rows(hmax, 1, ninf))

        # ---- im2col tap rows, (di, dj, channel) order == HWIO flatten -------
        def tap_rows(r, p):
            h = jnp.concatenate(
                [r if dj == 0 else shift_cols(r, dj, 0.0)
                 for dj in range(-p, p + 1)], axis=0)
            return [h if di == 0 else shift_rows(h, di, 0.0)
                    for di in range(-p, p + 1)]

        # patch stack rows: [x | pooled | 25 taps of r5 | 9 taps of r3]
        pstack = jnp.concatenate(
            [x, pooled] + tap_rows(r5, 2) + tap_rows(r3, 1), axis=0)

        # ---- one fused MXU matmul produces the whole module output ----------
        # (1x1 branch, 3x3 branch, 5x5 branch, pool projection and the scaled
        #  residual 1x1 conv are all folded into w2/b2 -- see prepare_params.)
        out = (jnp.dot(w2_ref[...], pstack, preferred_element_type=jnp.float32)
               + b2_ref[...])
        out_ref[...] = out             # (Cout, L): dense, unmasked store

        # TODO(synk): at realistic Inception channel counts cast the matmul
        # inputs to bf16 (keep f32 accumulate) and replace the im2col patch
        # stack with per-tap accumulation to avoid multi-MB live slabs.

    return kernel


# --------------------------------------------------------------------------
def prepare_params(params, scale_factor):
    """One-time host-side weight fusion (kept out of the per-call path).

    params (all float32):
      w1   (Cin, ch1),  b1  (ch1,)          branch1x1
      w3r  (Cin, ch3r), b3r (ch3r,)         branch3x3_1 (1x1 reduce)
      w3   (3,3,ch3r,ch3) HWIO, b3 (ch3,)   branch3x3_2
      w5r  (Cin, ch5r), b5r (ch5r,)         branch5x5_1 (1x1 reduce)
      w5   (5,5,ch5r,ch5) HWIO, b5 (ch5,)   branch5x5_2
      wp   (Cin, chp),  bp  (chp,)          pool projection
      wres (Cin, cout) / None, bres (cout,) / None   residual 1x1
    """
    (w1, b1, w3r, b3r, w3, b3, w5r, b5r, w5, b5, wp, bp, wres, bres) = params
    Cin, ch1 = w1.shape
    ch3r, ch3 = w3r.shape[1], w3.shape[3]
    ch5r, ch5 = w5r.shape[1], w5.shape[3]
    chp = wp.shape[1]
    cout = ch1 + ch3 + ch5 + chp
    if wres is None:                       # identity residual (cout == Cin)
        wres = jnp.eye(Cin, dtype=jnp.float32)
        bres = jnp.zeros((cout,), jnp.float32)

    # matmul 1: the two 1x1 reduce convs, output rows [r3 | r5]
    w_red = jnp.concatenate([w3r, w5r], axis=1).T            # (ch3r+ch5r, Cin)
    b_red = jnp.concatenate([b3r, b5r]).reshape(-1, 1)

    # matmul 2: block-structured (cout, K2) acting on
    #   [x (Cin) | pooled (Cin) | 5x5 taps (25*ch5r) | 3x3 taps (9*ch3r)]
    K2 = 2 * Cin + 25 * ch5r + 9 * ch3r
    w2 = jnp.zeros((cout, K2), jnp.float32)
    w2 = w2.at[0:ch1, 0:Cin].add(w1.T)                       # branch1x1
    w2 = w2.at[:, 0:Cin].add(scale_factor * wres.T)          # scaled residual
    w2 = w2.at[cout - chp:cout, Cin:2 * Cin].set(wp.T)       # pool projection
    o5 = ch1 + ch3
    w2 = w2.at[o5:o5 + ch5, 2 * Cin:2 * Cin + 25 * ch5r].set(
        w5.reshape(25 * ch5r, ch5).T)                        # branch5x5_2
    w2 = w2.at[ch1:ch1 + ch3, 2 * Cin + 25 * ch5r:K2].set(
        w3.reshape(9 * ch3r, ch3).T)                         # branch3x3_2
    b2 = (jnp.concatenate([b1, b3, b5, bp])
          + scale_factor * bres).reshape(-1, 1)
    return w_red, b_red, w2, b2, (ch3r, ch5r)


def inception_resnet_pallas(x_nchw, prepared, *, split_batch_over_grid=False):
    """x_nchw: (N, Cin, H, W) f32 -> (N, Cout, H, W) f32.

    split_batch_over_grid=True keeps a batch grid axis marked "parallel" so
    v7x's two TensorCores each take part of the batch; the default folds the
    batch into the matmul lane dimension (best on single-TC v5e/v6e).
    """
    w_red, b_red, w2, b2, (ch3r, ch5r) = prepared
    N, Cin, H, W = x_nchw.shape
    cout = w2.shape[0]
    HW = H * W

    # channels-in-sublanes / pixels-in-lanes layout
    x_flat = jnp.transpose(x_nchw, (1, 0, 2, 3)).reshape(Cin, N * HW)
    weights = (w_red, b_red, w2, b2)

    def full_spec(shape):
        nd = len(shape)
        return pl.BlockSpec(shape, lambda *_: (0,) * nd)

    if split_batch_over_grid and N > 1:
        grid = (N,)
        x_spec = pl.BlockSpec((Cin, HW), lambda b: (0, b))
        o_spec = pl.BlockSpec((cout, HW), lambda b: (0, b))
        dims = ("parallel",)
    else:
        grid = (1,)
        x_spec = pl.BlockSpec((Cin, N * HW), lambda b: (0, 0))
        o_spec = pl.BlockSpec((cout, N * HW), lambda b: (0, 0))
        dims = ("arbitrary",)

    out = pl.pallas_call(
        _make_kernel(H, W, ch3r, ch5r),
        out_shape=jax.ShapeDtypeStruct((cout, N * HW), jnp.float32),
        grid=grid,
        in_specs=[x_spec] + [full_spec(w.shape) for w in weights],
        out_specs=o_spec,
        compiler_params=pltpu.CompilerParams(dimension_semantics=dims),
    )(x_flat, *weights)

    # TODO(synk): for realistic Inception shapes (e.g. 35x35, Cin>=256) add a
    # spatial grid axis with halo handling and set
    # pltpu.CompilerParams(vmem_limit_bytes=...) against v7x's 64 MiB VMEM
    # (and v5e's 16 MiB scoped default), budgeting 2x per double-buffered spec.
    return jnp.transpose(out.reshape(cout, N, H, W), (1, 0, 2, 3))


# ----------------------------- reference (pure JAX, mirrors PyTorch) --------
def _conv_nchw(x, w_hwio, b, pad):
    out = lax.conv_general_dilated(
        x, w_hwio, window_strides=(1, 1),
        padding=[(pad, pad), (pad, pad)],
        dimension_numbers=("NCHW", "HWIO", "NCHW"))
    return out + b.reshape(1, -1, 1, 1)


def reference(x_nchw, params, scale_factor):
    (w1, b1, w3r, b3r, w3, b3, w5r, b5r, w5, b5, wp, bp, wres, bres) = params

    def c1x1(x, w, b):
        return _conv_nchw(x, w.reshape(1, 1, *w.shape), b, 0)

    b1x1 = c1x1(x_nchw, w1, b1)
    b3x3 = _conv_nchw(c1x1(x_nchw, w3r, b3r), w3, b3, 1)
    b5x5 = _conv_nchw(c1x1(x_nchw, w5r, b5r), w5, b5, 2)
    pooled = lax.reduce_window(
        x_nchw, -jnp.inf, lax.max, (1, 1, 3, 3), (1, 1, 1, 1),
        padding=[(0, 0), (0, 0), (1, 1), (1, 1)])
    bpool = c1x1(pooled, wp, bp)
    cat = jnp.concatenate([b1x1, b3x3, b5x5, bpool], axis=1)
    res = c1x1(x_nchw, wres, bres) if wres is not None else x_nchw
    return cat + scale_factor * res


# ----------------------------- setup & run ----------------------------------
if __name__ == "__main__":
    # module hyperparameters (small, consistent with the PyTorch module)
    in_channels, ch1x1, ch3x3_reduce, ch3x3 = 4, 8, 4, 8
    ch5x5_reduce, ch5x5, pool_proj = 4, 8, 8
    scale_factor = 0.2
    N, H, W = 2, 16, 16
    cout = ch1x1 + ch3x3 + ch5x5 + pool_proj   # 32 != 4 -> residual conv exists

    key = jax.random.PRNGKey(0)
    ks = jax.random.split(key, 16)

    def wgt(k, shape):
        return (0.1 * jax.random.normal(k, shape)).astype(jnp.float32)

    w1 = wgt(ks[0], (in_channels, ch1x1));            b1 = wgt(ks[1], (ch1x1,))
    w3r = wgt(ks[2], (in_channels, ch3x3_reduce));    b3r = wgt(ks[3], (ch3x3_reduce,))
    w3 = wgt(ks[4], (3, 3, ch3x3_reduce, ch3x3));     b3 = wgt(ks[5], (ch3x3,))
    w5r = wgt(ks[6], (in_channels, ch5x5_reduce));    b5r = wgt(ks[7], (ch5x5_reduce,))
    w5 = wgt(ks[8], (5, 5, ch5x5_reduce, ch5x5));     b5 = wgt(ks[9], (ch5x5,))
    wp = wgt(ks[10], (in_channels, pool_proj));       bp = wgt(ks[11], (pool_proj,))
    if cout != in_channels:
        wres = wgt(ks[12], (in_channels, cout));      bres = wgt(ks[13], (cout,))
    else:
        wres, bres = None, None
    params = (w1, b1, w3r, b3r, w3, b3, w5r, b5r, w5, b5, wp, bp, wres, bres)

    prepared = prepare_params(params, scale_factor)   # one-time weight fusion

    # input in PyTorch NCHW convention
    x = jax.random.normal(ks[15], (N, in_channels, H, W), jnp.float32)

    out = jax.block_until_ready(inception_resnet_pallas(x, prepared))
    ref = jax.block_until_ready(reference(x, params, scale_factor))
    np.testing.assert_allclose(np.asarray(out), np.asarray(ref),
                               rtol=1e-4, atol=1e-4)

    print("KERNEL_OK")
</pallas_src>

<mosaic_0001>
module attributes {stable_mosaic.version = 11 : i64} {
  func.func @kernel(%arg0: i32, %arg1: memref<4x512xf32, #tpu.memory_space<vmem>>, %arg2: memref<8x4xf32, #tpu.memory_space<vmem>>, %arg3: memref<8x1xf32, #tpu.memory_space<vmem>>, %arg4: memref<32x144xf32, #tpu.memory_space<vmem>>, %arg5: memref<32x1xf32, #tpu.memory_space<vmem>>, %arg6: memref<32x512xf32, #tpu.memory_space<vmem>>) attributes {dimension_semantics = [#tpu.dimension_semantics<arbitrary>], iteration_bounds = array<i64: 1>, scalar_prefetch = 0 : i64, scratch_operands = 0 : i64, tpu.core_type = #tpu.core_type<tc>, window_params = [{pipeline_mode = #tpu.pipeline_mode<synchronous>, transform_indices = @transform_0, window_bounds = array<i64: 4, 512>}, {pipeline_mode = #tpu.pipeline_mode<synchronous>, transform_indices = @transform_1, window_bounds = array<i64: 8, 4>}, {pipeline_mode = #tpu.pipeline_mode<synchronous>, transform_indices = @transform_2, window_bounds = array<i64: 8, 1>}, {pipeline_mode = #tpu.pipeline_mode<synchronous>, transform_indices = @transform_3, window_bounds = array<i64: 32, 144>}, {pipeline_mode = #tpu.pipeline_mode<synchronous>, transform_indices = @transform_4, window_bounds = array<i64: 32, 1>}, {pipeline_mode = #tpu.pipeline_mode<synchronous>, transform_indices = @transform_5, window_bounds = array<i64: 32, 512>}]} {
    %c0 = arith.constant 0 : index
    %c0_0 = arith.constant 0 : index
    %0 = vector.load %arg1[%c0, %c0_0] : memref<4x512xf32, #tpu.memory_space<vmem>>, vector<4x512xf32>
    %1 = tpu.iota {dimensions = array<i32: 1>} : vector<1x512xi32>
    %c16_i32 = arith.constant 16 : i32
    %c0_i32 = arith.constant 0 : i32
    %2 = arith.cmpi eq, %c16_i32, %c0_i32 : i32
    %c1_i32 = arith.constant 1 : i32
    %3 = arith.select %2, %c1_i32, %c16_i32 : i32
    %4 = vector.broadcast %3 : i32 to vector<1x512xi32>
    %5 = arith.remsi %1, %4 : vector<1x512xi32>
    %c0_i32_1 = arith.constant 0 : i32
    %6 = vector.broadcast %c0_i32_1 : i32 to vector<1x512xi32>
    %7 = arith.cmpi ne, %5, %6 : vector<1x512xi32>
    %c0_i32_2 = arith.constant 0 : i32
    %8 = vector.broadcast %c0_i32_2 : i32 to vector<1x512xi32>
    %9 = arith.cmpi slt, %5, %8 : vector<1x512xi32>
    %c0_i32_3 = arith.constant 0 : i32
    %10 = arith.cmpi slt, %3, %c0_i32_3 : i32
    %11 = vector.broadcast %10 : i1 to vector<1x512xi1>
    %12 = vector.broadcast %11 : vector<1x512xi1> to vector<1x512xi1>
    %13 = arith.xori %9, %12 : vector<1x512xi1>
    %14 = arith.andi %13, %7 : vector<1x512xi1>
    %15 = vector.broadcast %3 : i32 to vector<1x512xi32>
    %16 = arith.addi %5, %15 : vector<1x512xi32>
    %17 = arith.select %14, %16, %5 : vector<1x512xi1>, vector<1x512xi32>
    %c256_i32 = arith.constant 256 : i32
    %c0_i32_4 = arith.constant 0 : i32
    %18 = arith.cmpi eq, %c256_i32, %c0_i32_4 : i32
    %c1_i32_5 = arith.constant 1 : i32
    %19 = arith.select %18, %c1_i32_5, %c256_i32 : i32
    %20 = vector.broadcast %19 : i32 to vector<1x512xi32>
    %21 = arith.remsi %1, %20 : vector<1x512xi32>
    %c0_i32_6 = arith.constant 0 : i32
    %22 = vector.broadcast %c0_i32_6 : i32 to vector<1x512xi32>
    %23 = arith.cmpi ne, %21, %22 : vector<1x512xi32>
    %c0_i32_7 = arith.constant 0 : i32
    %24 = vector.broadcast %c0_i32_7 : i32 to vector<1x512xi32>
    %25 = arith.cmpi slt, %21, %24 : vector<1x512xi32>
    %c0_i32_8 = arith.constant 0 : i32
    %26 = arith.cmpi slt, %19, %c0_i32_8 : i32
    %27 = vector.broadcast %26 : i1 to vector<1x512xi1>
    %28 = vector.broadcast %27 : vector<1x512xi1> to vector<1x512xi1>
    %29 = arith.xori %25, %28 : vector<1x512xi1>
    %30 = arith.andi %29, %23 : vector<1x512xi1>
    %31 = vector.broadcast %19 : i32 to vector<1x512xi32>
    %32 = arith.addi %21, %31 : vector<1x512xi32>
    %33 = arith.select %30, %32, %21 : vector<1x512xi1>, vector<1x512xi32>
    %c15_i32 = arith.constant 15 : i32
    %34 = vector.broadcast %c15_i32 : i32 to vector<1x512xi32>
    %35 = arith.cmpi slt, %17, %34 : vector<1x512xi32>
    %c1_i32_9 = arith.constant 1 : i32
    %36 = vector.broadcast %c1_i32_9 : i32 to vector<1x512xi32>
    %37 = arith.cmpi sge, %17, %36 : vector<1x512xi32>
    %c240_i32 = arith.constant 240 : i32
    %38 = vector.broadcast %c240_i32 : i32 to vector<1x512xi32>
    %39 = arith.cmpi slt, %33, %38 : vector<1x512xi32>
    %c16_i32_10 = arith.constant 16 : i32
    %40 = vector.broadcast %c16_i32_10 : i32 to vector<1x512xi32>
    %41 = arith.cmpi sge, %33, %40 : vector<1x512xi32>
    %c14_i32 = arith.constant 14 : i32
    %42 = vector.broadcast %c14_i32 : i32 to vector<1x512xi32>
    %43 = arith.cmpi slt, %17, %42 : vector<1x512xi32>
    %c2_i32 = arith.constant 2 : i32
    %44 = vector.broadcast %c2_i32 : i32 to vector<1x512xi32>
    %45 = arith.cmpi sge, %17, %44 : vector<1x512xi32>
    %c224_i32 = arith.constant 224 : i32
    %46 = vector.broadcast %c224_i32 : i32 to vector<1x512xi32>
    %47 = arith.cmpi slt, %33, %46 : vector<1x512xi32>
    %c32_i32 = arith.constant 32 : i32
    %48 = vector.broadcast %c32_i32 : i32 to vector<1x512xi32>
    %49 = arith.cmpi sge, %33, %48 : vector<1x512xi32>
    %c0_11 = arith.constant 0 : index
    %c0_12 = arith.constant 0 : index
    %50 = vector.load %arg2[%c0_11, %c0_12] : memref<8x4xf32, #tpu.memory_space<vmem>>, vector<8x4xf32>
    %cst = arith.constant dense<0.000000e+00> : vector<8x512xf32>
    %51 = tpu.matmul %50, %0, %cst {dimension_numbers = #tpu.dot_dimension_numbers<[1], [0], [0], [1], [0, 0, 1, 1], [], []>} : vector<8x4xf32>, vector<4x512xf32>, vector<8x512xf32> -> vector<8x512xf32>
    %c0_13 = arith.constant 0 : index
    %c0_14 = arith.constant 0 : index
    %52 = vector.load %arg3[%c0_13, %c0_14] : memref<8x1xf32, #tpu.memory_space<vmem>>, vector<8x1xf32>
    %53 = vector.broadcast %52 : vector<8x1xf32> to vector<8x512xf32>
    %54 = arith.addf %51, %53 : vector<8x512xf32>
    %55 = vector.extract_strided_slice %54 {offsets = [0, 0], sizes = [4, 512], strides = [1, 1]} : vector<8x512xf32> to vector<4x512xf32>
    %56 = vector.extract_strided_slice %54 {offsets = [4, 0], sizes = [4, 512], strides = [1, 1]} : vector<8x512xf32> to vector<4x512xf32>
    %c1_i32_15 = arith.constant 1 : i32
    %57 = tpu.dynamic_rotate %0 by %c1_i32_15 dim 1 : vector<4x512xf32>, i32 -> vector<4x512xf32>
    %cst_16 = arith.constant 0xFF800000 : f32
    %58 = vector.shape_cast %37 : vector<1x512xi1> to vector<1x512xi1>
    %59 = vector.broadcast %58 : vector<1x512xi1> to vector<4x512xi1>
    %60 = vector.broadcast %cst_16 : f32 to vector<4x512xf32>
    %61 = arith.select %59, %57, %60 : vector<4x512xi1>, vector<4x512xf32>
    %62 = arith.maximumf %61, %0 : vector<4x512xf32>
    %c511_i32 = arith.constant 511 : i32
    %63 = tpu.dynamic_rotate %0 by %c511_i32 dim 1 : vector<4x512xf32>, i32 -> vector<4x512xf32>
    %cst_17 = arith.constant 0xFF800000 : f32
    %64 = vector.shape_cast %35 : vector<1x512xi1> to vector<1x512xi1>
    %65 = vector.broadcast %64 : vector<1x512xi1> to vector<4x512xi1>
    %66 = vector.broadcast %cst_17 : f32 to vector<4x512xf32>
    %67 = arith.select %65, %63, %66 : vector<4x512xi1>, vector<4x512xf32>
    %68 = arith.maximumf %62, %67 : vector<4x512xf32>
    %c16_i32_18 = arith.constant 16 : i32
    %69 = tpu.dynamic_rotate %68 by %c16_i32_18 dim 1 : vector<4x512xf32>, i32 -> vector<4x512xf32>
    %cst_19 = arith.constant 0xFF800000 : f32
    %70 = vector.shape_cast %41 : vector<1x512xi1> to vector<1x512xi1>
    %71 = vector.broadcast %70 : vector<1x512xi1> to vector<4x512xi1>
    %72 = vector.broadcast %cst_19 : f32 to vector<4x512xf32>
    %73 = arith.select %71, %69, %72 : vector<4x512xi1>, vector<4x512xf32>
    %74 = arith.maximumf %73, %68 : vector<4x512xf32>
    %c496_i32 = arith.constant 496 : i32
    %75 = tpu.dynamic_rotate %68 by %c496_i32 dim 1 : vector<4x512xf32>, i32 -> vector<4x512xf32>
    %cst_20 = arith.constant 0xFF800000 : f32
    %76 = vector.shape_cast %39 : vector<1x512xi1> to vector<1x512xi1>
    %77 = vector.broadcast %76 : vector<1x512xi1> to vector<4x512xi1>
    %78 = vector.broadcast %cst_20 : f32 to vector<4x512xf32>
    %79 = arith.select %77, %75, %78 : vector<4x512xi1>, vector<4x512xf32>
    %80 = arith.maximumf %74, %79 : vector<4x512xf32>
    %c2_i32_21 = arith.constant 2 : i32
    %81 = tpu.dynamic_rotate %56 by %c2_i32_21 dim 1 : vector<4x512xf32>, i32 -> vector<4x512xf32>
    %cst_22 = arith.constant 0.000000e+00 : f32
    %82 = vector.shape_cast %45 : vector<1x512xi1> to vector<1x512xi1>
    %83 = vector.broadcast %82 : vector<1x512xi1> to vector<4x512xi1>
    %84 = vector.broadcast %cst_22 : f32 to vector<4x512xf32>
    %85 = arith.select %83, %81, %84 : vector<4x512xi1>, vector<4x512xf32>
    %c1_i32_23 = arith.constant 1 : i32
    %86 = tpu.dynamic_rotate %56 by %c1_i32_23 dim 1 : vector<4x512xf32>, i32 -> vector<4x512xf32>
    %cst_24 = arith.constant 0.000000e+00 : f32
    %87 = vector.shape_cast %37 : vector<1x512xi1> to vector<1x512xi1>
    %88 = vector.broadcast %87 : vector<1x512xi1> to vector<4x512xi1>
    %89 = vector.broadcast %cst_24 : f32 to vector<4x512xf32>
    %90 = arith.select %88, %86, %89 : vector<4x512xi1>, vector<4x512xf32>
    %c511_i32_25 = arith.constant 511 : i32
    %91 = tpu.dynamic_rotate %56 by %c511_i32_25 dim 1 : vector<4x512xf32>, i32 -> vector<4x512xf32>
    %cst_26 = arith.constant 0.000000e+00 : f32
    %92 = vector.shape_cast %35 : vector<1x512xi1> to vector<1x512xi1>
    %93 = vector.broadcast %92 : vector<1x512xi1> to vector<4x512xi1>
    %94 = vector.broadcast %cst_26 : f32 to vector<4x512xf32>
    %95 = arith.select %93, %91, %94 : vector<4x512xi1>, vector<4x512xf32>
    %c510_i32 = arith.constant 510 : i32
    %96 = tpu.dynamic_rotate %56 by %c510_i32 dim 1 : vector<4x512xf32>, i32 -> vector<4x512xf32>
    %cst_27 = arith.constant 0.000000e+00 : f32
    %97 = vector.shape_cast %43 : vector<1x512xi1> to vector<1x512xi1>
    %98 = vector.broadcast %97 : vector<1x512xi1> to vector<4x512xi1>
    %99 = vector.broadcast %cst_27 : f32 to vector<4x512xf32>
    %100 = arith.select %98, %96, %99 : vector<4x512xi1>, vector<4x512xf32>
    %101 = tpu.concatenate %85, %90, %56, %95, %100 in 0 : vector<4x512xf32>, vector<4x512xf32>, vector<4x512xf32>, vector<4x512xf32>, vector<4x512xf32> -> vector<20x512xf32>
    %c32_i32_28 = arith.constant 32 : i32
    %102 = tpu.dynamic_rotate %101 by %c32_i32_28 dim 1 : vector<20x512xf32>, i32 -> vector<20x512xf32>
    %cst_29 = arith.constant 0.000000e+00 : f32
    %103 = vector.shape_cast %49 : vector<1x512xi1> to vector<1x512xi1>
    %104 = vector.broadcast %103 : vector<1x512xi1> to vector<20x512xi1>
    %105 = vector.broadcast %cst_29 : f32 to vector<20x512xf32>
    %106 = arith.select %104, %102, %105 : vector<20x512xi1>, vector<20x512xf32>
    %c16_i32_30 = arith.constant 16 : i32
    %107 = tpu.dynamic_rotate %101 by %c16_i32_30 dim 1 : vector<20x512xf32>, i32 -> vector<20x512xf32>
    %cst_31 = arith.constant 0.000000e+00 : f32
    %108 = vector.shape_cast %41 : vector<1x512xi1> to vector<1x512xi1>
    %109 = vector.broadcast %108 : vector<1x512xi1> to vector<20x512xi1>
    %110 = vector.broadcast %cst_31 : f32 to vector<20x512xf32>
    %111 = arith.select %109, %107, %110 : vector<20x512xi1>, vector<20x512xf32>
    %c496_i32_32 = arith.constant 496 : i32
    %112 = tpu.dynamic_rotate %101 by %c496_i32_32 dim 1 : vector<20x512xf32>, i32 -> vector<20x512xf32>
    %cst_33 = arith.constant 0.000000e+00 : f32
    %113 = vector.shape_cast %39 : vector<1x512xi1> to vector<1x512xi1>
    %114 = vector.broadcast %113 : vector<1x512xi1> to vector<20x512xi1>
    %115 = vector.broadcast %cst_33 : f32 to vector<20x512xf32>
    %116 = arith.select %114, %112, %115 : vector<20x512xi1>, vector<20x512xf32>
    %c480_i32 = arith.constant 480 : i32
    %117 = tpu.dynamic_rotate %101 by %c480_i32 dim 1 : vector<20x512xf32>, i32 -> vector<20x512xf32>
    %cst_34 = arith.constant 0.000000e+00 : f32
    %118 = vector.shape_cast %47 : vector<1x512xi1> to vector<1x512xi1>
    %119 = vector.broadcast %118 : vector<1x512xi1> to vector<20x512xi1>
    %120 = vector.broadcast %cst_34 : f32 to vector<20x512xf32>
    %121 = arith.select %119, %117, %120 : vector<20x512xi1>, vector<20x512xf32>
    %c1_i32_35 = arith.constant 1 : i32
    %122 = tpu.dynamic_rotate %55 by %c1_i32_35 dim 1 : vector<4x512xf32>, i32 -> vector<4x512xf32>
    %cst_36 = arith.constant 0.000000e+00 : f32
    %123 = vector.shape_cast %37 : vector<1x512xi1> to vector<1x512xi1>
    %124 = vector.broadcast %123 : vector<1x512xi1> to vector<4x512xi1>
    %125 = vector.broadcast %cst_36 : f32 to vector<4x512xf32>
    %126 = arith.select %124, %122, %125 : vector<4x512xi1>, vector<4x512xf32>
    %c511_i32_37 = arith.constant 511 : i32
    %127 = tpu.dynamic_rotate %55 by %c511_i32_37 dim 1 : vector<4x512xf32>, i32 -> vector<4x512xf32>
    %cst_38 = arith.constant 0.000000e+00 : f32
    %128 = vector.shape_cast %35 : vector<1x512xi1> to vector<1x512xi1>
    %129 = vector.broadcast %128 : vector<1x512xi1> to vector<4x512xi1>
    %130 = vector.broadcast %cst_38 : f32 to vector<4x512xf32>
    %131 = arith.select %129, %127, %130 : vector<4x512xi1>, vector<4x512xf32>
    %132 = tpu.concatenate %126, %55, %131 in 0 : vector<4x512xf32>, vector<4x512xf32>, vector<4x512xf32> -> vector<12x512xf32>
    %c16_i32_39 = arith.constant 16 : i32
    %133 = tpu.dynamic_rotate %132 by %c16_i32_39 dim 1 : vector<12x512xf32>, i32 -> vector<12x512xf32>
    %cst_40 = arith.constant 0.000000e+00 : f32
    %134 = vector.shape_cast %41 : vector<1x512xi1> to vector<1x512xi1>
    %135 = vector.broadcast %134 : vector<1x512xi1> to vector<12x512xi1>
    %136 = vector.broadcast %cst_40 : f32 to vector<12x512xf32>
    %137 = arith.select %135, %133, %136 : vector<12x512xi1>, vector<12x512xf32>
    %c496_i32_41 = arith.constant 496 : i32
    %138 = tpu.dynamic_rotate %132 by %c496_i32_41 dim 1 : vector<12x512xf32>, i32 -> vector<12x512xf32>
    %cst_42 = arith.constant 0.000000e+00 : f32
    %139 = vector.shape_cast %39 : vector<1x512xi1> to vector<1x512xi1>
    %140 = vector.broadcast %139 : vector<1x512xi1> to vector<12x512xi1>
    %141 = vector.broadcast %cst_42 : f32 to vector<12x512xf32>
    %142 = arith.select %140, %138, %141 : vector<12x512xi1>, vector<12x512xf32>
    %143 = tpu.concatenate %0, %80, %106, %111, %101, %116, %121, %137, %132, %142 in 0 : vector<4x512xf32>, vector<4x512xf32>, vector<20x512xf32>, vector<20x512xf32>, vector<20x512xf32>, vector<20x512xf32>, vector<20x512xf32>, vector<12x512xf32>, vector<12x512xf32>, vector<12x512xf32> -> vector<144x512xf32>
    %c0_43 = arith.constant 0 : index
    %c0_44 = arith.constant 0 : index
    %144 = vector.load %arg4[%c0_43, %c0_44] : memref<32x144xf32, #tpu.memory_space<vmem>>, vector<32x144xf32>
    %cst_45 = arith.constant dense<0.000000e+00> : vector<32x512xf32>
    %145 = tpu.matmul %144, %143, %cst_45 {dimension_numbers = #tpu.dot_dimension_numbers<[1], [0], [0], [1], [0, 0, 1, 1], [], []>} : vector<32x144xf32>, vector<144x512xf32>, vector<32x512xf32> -> vector<32x512xf32>
    %c0_46 = arith.constant 0 : index
    %c0_47 = arith.constant 0 : index
    %146 = vector.load %arg5[%c0_46, %c0_47] : memref<32x1xf32, #tpu.memory_space<vmem>>, vector<32x1xf32>
    %147 = vector.broadcast %146 : vector<32x1xf32> to vector<32x512xf32>
    %148 = arith.addf %145, %147 : vector<32x512xf32>
    %c0_48 = arith.constant 0 : index
    %c0_49 = arith.constant 0 : index
    %149 = vector.load %arg6[%c0_48, %c0_49] : memref<32x512xf32, #tpu.memory_space<vmem>>, vector<32x512xf32>
    tpu.vector_store %arg6[%c0_48, %c0_49], %148 {strides = array<i32>} : memref<32x512xf32, #tpu.memory_space<vmem>>, vector<32x512xf32>,
    return
  }
  func.func @transform_0(%arg0: i32) -> (i32, i32) {
    %c0_i32 = arith.constant 0 : i32
    %c0_i32_0 = arith.constant 0 : i32
    %c0_i32_1 = arith.constant 0 : i32
    return %c0_i32, %c0_i32_0 : i32, i32
  }
  func.func @transform_1(%arg0: i32) -> (i32, i32) {
    %c0_i32 = arith.constant 0 : i32
    %c0_i32_0 = arith.constant 0 : i32
    %c0_i32_1 = arith.constant 0 : i32
    return %c0_i32, %c0_i32_0 : i32, i32
  }
  func.func @transform_2(%arg0: i32) -> (i32, i32) {
    %c0_i32 = arith.constant 0 : i32
    %c0_i32_0 = arith.constant 0 : i32
    %c0_i32_1 = arith.constant 0 : i32
    return %c0_i32, %c0_i32_0 : i32, i32
  }
  func.func @transform_3(%arg0: i32) -> (i32, i32) {
    %c0_i32 = arith.constant 0 : i32
    %c0_i32_0 = arith.constant 0 : i32
    %c0_i32_1 = arith.constant 0 : i32
    return %c0_i32, %c0_i32_0 : i32, i32
  }
  func.func @transform_4(%arg0: i32) -> (i32, i32) {
    %c0_i32 = arith.constant 0 : i32
    %c0_i32_0 = arith.constant 0 : i32
    %c0_i32_1 = arith.constant 0 : i32
    return %c0_i32, %c0_i32_0 : i32, i32
  }
  func.func @transform_5(%arg0: i32) -> (i32, i32) {
    %c0_i32 = arith.constant 0 : i32
    %c0_i32_0 = arith.constant 0 : i32
    %c0_i32_1 = arith.constant 0 : i32
    return %c0_i32, %c0_i32_0 : i32, i32
  }
}

</mosaic_0001>

<llo_original>
// kernel: tpu_custom_call.1
$region0: #{tpu_custom_call.1}
  #allocation0 [shape = 'u32[]', space=smem, size = 0x4, offset = 0x4, fixed_abs, tag = 'smem constant byte address 0x4 - core index']
  #allocation1 [shape = 'u32[144,128]{1,0:T(1,128)}', space=vmem, size = 0x12000, scoped, tag = 'internal scratch']
  %s0 = inlined_call_operand.hbm [shape: f32[4,512], index: 0, kind: input, shape index: {}]
  %s1 = inlined_call_operand.vmem [shape: f32[8,4], index: 1, kind: input, shape index: {}]
  %s2 = inlined_call_operand.vmem [shape: f32[8,1], index: 2, kind: input, shape index: {}]
  %s3 = inlined_call_operand.vmem [shape: f32[32,144], index: 3, kind: input, shape index: {}]
  %s4 = inlined_call_operand.vmem [shape: f32[32,1], index: 4, kind: input, shape index: {}]
  %s5 = inlined_call_operand.hbm [shape: f32[32,512], index: 5, kind: output, shape index: {}]
  %s6 = sld [smem:[#allocation0]]
  $region34: #{tpu_custom_call.1} parent=0
    _
  %s8 = ssub.s32 1, %s6
  %s9 = scalar_select 0, %s8, %s6
  $region1: #{tpu_custom_call.1} parent=0
    #allocation2 [shape = 'u8[8192]{0}', space=vmem, size = 0x2000, scoped, tag = 'input window, operand 0, single buffered']
    #allocation3 [shape = 's32[1]{0}', space=sflag, size = 0x4, scoped, tag = 'scoped memory for tpu_custom_call.1']
    #allocation4 [shape = 's32[1]{0}', space=sflag, size = 0x4, scoped, tag = 'scoped memory for tpu_custom_call.1']
    #allocation5 [shape = 'u8[65536]{0}', space=vmem, size = 0x10000, scoped, tag = 'output window, operand 0, single buffered']
    %10 = vsyncpa [#allocation3], 0
    %11 = vsyncpa [#allocation4], 0
    // Predicated region
    $region2: #{tpu_custom_call.1} parent=1 // pred_check
      _
    $region3: #{tpu_custom_call.1} parent=1 // pred_check_branch
      %13 = sbr.rel (0) target = $region5
    $region4: #{tpu_custom_call.1} parent=1 // pred_region
      %s15 = ssub.s32 256, 256
      %16 = vsyncadd [#allocation3], %s15
      %s18 = sshll.u32 [#allocation2], 4
      %s19 = int_to_ptr.vmem [resolvable:$true] %s18
      %21 = dma.hbm_to_vmem [thread:$0]  %s0, 256, %s19, [#allocation3]
    $region5: #{tpu_custom_call.1} parent=1 // pred_fallthru
      _
    // Predicated region
    $region6: #{tpu_custom_call.1} parent=1 // pred_check
      _
    $region7: #{tpu_custom_call.1} parent=1 // pred_check_branch
      %23 = sbr.rel (0) target = $region9
    $region8: #{tpu_custom_call.1} parent=1 // pred_region
      _
    $region9: #{tpu_custom_call.1} parent=1 // pred_fallthru
      _
    // Predicated region
    $region10: #{tpu_custom_call.1} parent=1 // pred_check
      _
    $region11: #{tpu_custom_call.1} parent=1 // pred_check_branch
      %25 = sbr.rel (0) target = $region13
    $region12: #{tpu_custom_call.1} parent=1 // pred_region
      _
    $region13: #{tpu_custom_call.1} parent=1 // pred_fallthru
      _
    // Predicated region
    $region14: #{tpu_custom_call.1} parent=1 // pred_check
      _
    $region15: #{tpu_custom_call.1} parent=1 // pred_check_branch
      %27 = sbr.rel (0) target = $region17
    $region16: #{tpu_custom_call.1} parent=1 // pred_region
      _
    $region17: #{tpu_custom_call.1} parent=1 // pred_fallthru
      _
    // Predicated region
    $region18: #{tpu_custom_call.1} parent=1 // pred_check
      _
    $region19: #{tpu_custom_call.1} parent=1 // pred_check_branch
      %29 = sbr.rel (0) target = $region21
    $region20: #{tpu_custom_call.1} parent=1 // pred_region
      _
    $region21: #{tpu_custom_call.1} parent=1 // pred_fallthru
      _
    // Predicated region
    $region22: #{tpu_custom_call.1} parent=1 // pred_check
      _
    $region23: #{tpu_custom_call.1} parent=1 // pred_check_branch
      %31 = sbr.rel (0) target = $region25
    $region24: #{tpu_custom_call.1} parent=1 // pred_region
      %32 = dma.done [#allocation3], 256
    $region25: #{tpu_custom_call.1} parent=1 // pred_fallthru
      _
    %v33 = vld [vmem:[#allocation2] sm:$0xff]
    %v34 = vld [vmem:[#allocation2 + $0x8] sm:$0xff]
    %v35 = vlaneseq
    %v36 = vand.u32 %v35, 127
    %v37 = vadd.s32 %v36, 128
    %v38 = vadd.s32 %v36, 256
    %v39 = vadd.s32 %v36, 384
    %vm40 = vcmp.lt.s32.totalorder %v36, 0
    %v41 = vsub.s32 0, %v36
    %v42 = vsel %vm40, %v41, %v36
    %v43 = vshrl.u32 %v42, 4
    %v44 = vand.u32 %v42, 15
    %v45 = vsub.s32 0, %v44
    %v46 = vsel %vm40, %v45, %v44
    %vm47 = vcmp.lt.s32.totalorder %v37, 0
    %v48 = vsub.s32 0, %v37
    %v49 = vsel %vm47, %v48, %v37
    %v50 = vshrl.u32 %v49, 4
    %v51 = vand.u32 %v49, 15
    %v52 = vsub.s32 0, %v51
    %v53 = vsel %vm47, %v52, %v51
    %vm54 = vcmp.lt.s32.totalorder %v38, 0
    %v55 = vsub.s32 0, %v38
    %v56 = vsel %vm54, %v55, %v38
    %v57 = vshrl.u32 %v56, 4
    %v58 = vand.u32 %v56, 15
    %v59 = vsub.s32 0, %v58
    %v60 = vsel %vm54, %v59, %v58
    %vm61 = vcmp.lt.s32.totalorder %v39, 0
    %v62 = vsub.s32 0, %v39
    %v63 = vsel %vm61, %v62, %v39
    %v64 = vshrl.u32 %v63, 4
    %v65 = vand.u32 %v63, 15
    %v66 = vsub.s32 0, %v65
    %v67 = vsel %vm61, %v66, %v65
    %vm68 = vcmp.ne.s32.totalorder %v46, 0
    %vm69 = vcmp.ne.s32.totalorder %v53, 0
    %vm70 = vcmp.ne.s32.totalorder %v60, 0
    %vm71 = vcmp.ne.s32.totalorder %v67, 0
    %vm72 = vcmp.lt.s32.totalorder %v46, 0
    %vm73 = vcmp.lt.s32.totalorder %v53, 0
    %vm74 = vcmp.lt.s32.totalorder %v60, 0
    %vm75 = vcmp.lt.s32.totalorder %v67, 0
    %vm76 = vmand %vm72, %vm68
    %vm77 = vmand %vm73, %vm69
    %vm78 = vmand %vm74, %vm70
    %vm79 = vmand %vm75, %vm71
    %v80 = vadd.s32 %v46, 16
    %v81 = vadd.s32 %v53, 16
    %v82 = vadd.s32 %v60, 16
    %v83 = vadd.s32 %v67, 16
    %v84 = vsel %vm76, %v80, %v46
    %v85 = vsel %vm77, %v81, %v53
    %v86 = vsel %vm78, %v82, %v60
    %v87 = vsel %vm79, %v83, %v67
    %vm88 = vcmp.lt.s32.totalorder %v36, 0
    %v89 = vsub.s32 0, %v36
    %v90 = vsel %vm88, %v89, %v36
    %v91 = vshrl.u32 %v90, 8
    %v92 = vand.u32 %v90, 255
    %v93 = vsub.s32 0, %v92
    %v94 = vsel %vm88, %v93, %v92
    %vm95 = vcmp.lt.s32.totalorder %v37, 0
    %v96 = vsub.s32 0, %v37
    %v97 = vsel %vm95, %v96, %v37
    %v98 = vshrl.u32 %v97, 8
    %v99 = vand.u32 %v97, 255
    %v100 = vsub.s32 0, %v99
    %v101 = vsel %vm95, %v100, %v99
    %vm102 = vcmp.lt.s32.totalorder %v38, 0
    %v103 = vsub.s32 0, %v38
    %v104 = vsel %vm102, %v103, %v38
    %v105 = vshrl.u32 %v104, 8
    %v106 = vand.u32 %v104, 255
    %v107 = vsub.s32 0, %v106
    %v108 = vsel %vm102, %v107, %v106
    %vm109 = vcmp.lt.s32.totalorder %v39, 0
    %v110 = vsub.s32 0, %v39
    %v111 = vsel %vm109, %v110, %v39
    %v112 = vshrl.u32 %v111, 8
    %v113 = vand.u32 %v111, 255
    %v114 = vsub.s32 0, %v113
    %v115 = vsel %vm109, %v114, %v113
    %vm116 = vcmp.ne.s32.totalorder %v94, 0
    %vm117 = vcmp.ne.s32.totalorder %v101, 0
    %vm118 = vcmp.ne.s32.totalorder %v108, 0
    %vm119 = vcmp.ne.s32.totalorder %v115, 0
    %vm120 = vcmp.lt.s32.totalorder %v94, 0
    %vm121 = vcmp.lt.s32.totalorder %v101, 0
    %vm122 = vcmp.lt.s32.totalorder %v108, 0
    %vm123 = vcmp.lt.s32.totalorder %v115, 0
    %vm124 = vmand %vm120, %vm116
    %vm125 = vmand %vm121, %vm117
    %vm126 = vmand %vm122, %vm118
    %vm127 = vmand %vm123, %vm119
    %v128 = vadd.s32 %v94, 256
    %v129 = vadd.s32 %v101, 256
    %v130 = vadd.s32 %v108, 256
    %v131 = vadd.s32 %v115, 256
    %v132 = vsel %vm124, %v128, %v94
    %v133 = vsel %vm125, %v129, %v101
    %v134 = vsel %vm126, %v130, %v108
    %v135 = vsel %vm127, %v131, %v115
    %vm136 = vcmp.lt.s32.totalorder %v84, 15
    %vm137 = vcmp.lt.s32.totalorder %v85, 15
    %vm138 = vcmp.lt.s32.totalorder %v86, 15
    %vm139 = vcmp.lt.s32.totalorder %v87, 15
    %vm140 = vcmp.ge.s32.totalorder %v84, 1
    %vm141 = vcmp.ge.s32.totalorder %v85, 1
    %vm142 = vcmp.ge.s32.totalorder %v86, 1
    %vm143 = vcmp.ge.s32.totalorder %v87, 1
    %vm144 = vcmp.lt.s32.totalorder %v132, 240
    %vm145 = vcmp.lt.s32.totalorder %v133, 240
    %vm146 = vcmp.lt.s32.totalorder %v134, 240
    %vm147 = vcmp.lt.s32.totalorder %v135, 240
    %vm148 = vcmp.ge.s32.totalorder %v132, 16
    %vm149 = vcmp.ge.s32.totalorder %v133, 16
    %vm150 = vcmp.ge.s32.totalorder %v134, 16
    %vm151 = vcmp.ge.s32.totalorder %v135, 16
    %vm152 = vcmp.lt.s32.totalorder %v84, 14
    %vm153 = vcmp.lt.s32.totalorder %v85, 14
    %vm154 = vcmp.lt.s32.totalorder %v86, 14
    %vm155 = vcmp.lt.s32.totalorder %v87, 14
    %vm156 = vcmp.ge.s32.totalorder %v84, 2
    %vm157 = vcmp.ge.s32.totalorder %v85, 2
    %vm158 = vcmp.ge.s32.totalorder %v86, 2
    %vm159 = vcmp.ge.s32.totalorder %v87, 2
    %vm160 = vcmp.lt.s32.totalorder %v132, 224
    %vm161 = vcmp.lt.s32.totalorder %v133, 224
    %vm162 = vcmp.lt.s32.totalorder %v134, 224
    %vm163 = vcmp.lt.s32.totalorder %v135, 224
    %vm164 = vcmp.ge.s32.totalorder %v132, 32
    %vm165 = vcmp.ge.s32.totalorder %v133, 32
    %vm166 = vcmp.ge.s32.totalorder %v134, 32
    %vm167 = vcmp.ge.s32.totalorder %v135, 32
    %v168 = vld [vmem:[%s1] sm:$0xff]
    %v169 = vld [vmem:[%s2] sm:$0xff]
    %171 = vset.pattern.permute.xlu0 0
    %172 = vperm.xlu0 %171, %v169
    %v173 = vpop.permute.xlu0 %172
    %v177 = vcombine.high %v33, %v33
    %v178 = vcombine.high %v34, %v34
    %vm179 = vcmask 31744
    %v181 = vsel %vm179, %v168, 0
    %vm183 = vcmask 1043456
    %v184 = vsel %vm183, %v33, 0
    %v186 = vsel %vm183, %v177, 0
    %v188 = vsel %vm183, %v34, 0
    %v190 = vsel %vm183, %v178, 0
    %192 = vmatprep.subr.mxu0 %v186
    %193 = vmatpush1.msra.mxu0 %v184
    %194 = vmatprep.subr.mxu0 0.0
    %195 = vmatpush1.msra.mxu0 0.0
    %196 = vmatprep.subr.mxu0 0.0
    %197 = vmatpush1.msra.mxu0 0.0
    %198 = vmatprep.subr.mxu0 0.0
    %199 = vmatpush1.msra.mxu0 0.0
    %200 = vmatprep.subr.mxu0 0.0
    %201 = vmatpush1.msra.mxu0 0.0
    %202 = vmatprep.subr.mxu0 0.0
    %203 = vmatpush1.msra.mxu0 0.0
    %204 = vmatprep.subr.mxu0 0.0
    %205 = vmatpush1.msra.mxu0 0.0
    %206 = vmatprep.subr.mxu0 0.0
    %207 = vmatpush1.msra.mxu0 0.0
    %208 = vmatprep.subr.mxu0 0.0
    %209 = vmatpush1.msra.mxu0 0.0
    %210 = vmatprep.subr.mxu0 0.0
    %211 = vmatpush1.msra.mxu0 0.0
    %212 = vmatprep.subr.mxu0 0.0
    %213 = vmatpush1.msra.mxu0 0.0
    %214 = vmatprep.subr.mxu0 0.0
    %215 = vmatpush1.msra.mxu0 0.0
    %216 = vmatprep.subr.mxu0 0.0
    %217 = vmatpush1.msra.mxu0 0.0
    %218 = vmatprep.subr.mxu0 0.0
    %219 = vmatpush1.msra.mxu0 0.0
    %220 = vmatprep.subr.mxu0 0.0
    %221 = vmatpush1.msra.mxu0 0.0
    %222 = vmatprep.subr.mxu0 0.0
    %223 = vmatpush1.msra.mxu0 0.0
    %224 = vmatprep.subr.mxu0 0.0
    %225 = vmatpush1.msra.mxu0 0.0
    %226 = vmatprep.subr.mxu0 0.0
    %227 = vmatpush1.msra.mxu0 0.0
    %228 = vmatprep.subr.mxu0 0.0
    %229 = vmatpush1.msra.mxu0 0.0
    %230 = vmatprep.subr.mxu0 0.0
    %231 = vmatpush1.msra.mxu0 0.0
    %232 = vmatprep.subr.mxu0 0.0
    %233 = vmatpush1.msra.mxu0 0.0
    %234 = vmatprep.subr.mxu0 0.0
    %235 = vmatpush1.msra.mxu0 0.0
    %236 = vmatprep.subr.mxu0 0.0
    %237 = vmatpush1.msra.mxu0 0.0
    %238 = vmatprep.subr.mxu0 0.0
    %239 = vmatpush1.msra.mxu0 0.0
    %240 = vmatprep.subr.mxu0 0.0
    %241 = vmatpush1.msra.mxu0 0.0
    %242 = vmatprep.subr.mxu0 0.0
    %243 = vmatpush1.msra.mxu0 0.0
    %244 = vmatprep.subr.mxu0 0.0
    %245 = vmatpush1.msra.mxu0 0.0
    %246 = vmatprep.subr.mxu0 0.0
    %247 = vmatpush1.msra.mxu0 0.0
    %248 = vmatprep.subr.mxu0 0.0
    %249 = vmatpush1.msra.mxu0 0.0
    %250 = vmatprep.subr.mxu0 0.0
    %251 = vmatpush1.msra.mxu0 0.0
    %252 = vmatprep.subr.mxu0 0.0
    %253 = vmatpush1.msra.mxu0 0.0
    %254 = vmatprep.subr.mxu0 0.0
    %255 = vmatpush1.msra.mxu0 0.0
    %256 = vmatprep.mubr.f32.mxu0 0.0
    %257 = vmatmul.mubr.f32.gmra.mrb[0].mxu0 %v181
    %v258 = vpop.f32.mrb[0].mxu0
    %v259 = vadd.f32 %v173, %v258
    %v260 = vpop.f32.mrb[0].mxu0
    %v261 = vadd.f32 %v173, %v260
    %262 = vdwg.mxu0
    %263 = vmatprep.subr.mxu0 %v190
    %264 = vmatpush1.msra.mxu0 %v188
    %265 = vmatprep.subr.mxu0 0.0
    %266 = vmatpush1.msra.mxu0 0.0
    %267 = vmatprep.subr.mxu0 0.0
    %268 = vmatpush1.msra.mxu0 0.0
    %269 = vmatprep.subr.mxu0 0.0
    %270 = vmatpush1.msra.mxu0 0.0
    %271 = vmatprep.subr.mxu0 0.0
    %272 = vmatpush1.msra.mxu0 0.0
    %273 = vmatprep.subr.mxu0 0.0
    %274 = vmatpush1.msra.mxu0 0.0
    %275 = vmatprep.subr.mxu0 0.0
    %276 = vmatpush1.msra.mxu0 0.0
    %277 = vmatprep.subr.mxu0 0.0
    %278 = vmatpush1.msra.mxu0 0.0
    %279 = vmatprep.subr.mxu0 0.0
    %280 = vmatpush1.msra.mxu0 0.0
    %281 = vmatprep.subr.mxu0 0.0
    %282 = vmatpush1.msra.mxu0 0.0
    %283 = vmatprep.subr.mxu0 0.0
    %284 = vmatpush1.msra.mxu0 0.0
    %285 = vmatprep.subr.mxu0 0.0
    %286 = vmatpush1.msra.mxu0 0.0
    %287 = vmatprep.subr.mxu0 0.0
    %288 = vmatpush1.msra.mxu0 0.0
    %289 = vmatprep.subr.mxu0 0.0
    %290 = vmatpush1.msra.mxu0 0.0
    %291 = vmatprep.subr.mxu0 0.0
    %292 = vmatpush1.msra.mxu0 0.0
    %293 = vmatprep.subr.mxu0 0.0
    %294 = vmatpush1.msra.mxu0 0.0
    %295 = vmatprep.subr.mxu0 0.0
    %296 = vmatpush1.msra.mxu0 0.0
    %297 = vmatprep.subr.mxu0 0.0
    %298 = vmatpush1.msra.mxu0 0.0
    %299 = vmatprep.subr.mxu0 0.0
    %300 = vmatpush1.msra.mxu0 0.0
    %301 = vmatprep.subr.mxu0 0.0
    %302 = vmatpush1.msra.mxu0 0.0
    %303 = vmatprep.subr.mxu0 0.0
    %304 = vmatpush1.msra.mxu0 0.0
    %305 = vmatprep.subr.mxu0 0.0
    %306 = vmatpush1.msra.mxu0 0.0
    %307 = vmatprep.subr.mxu0 0.0
    %308 = vmatpush1.msra.mxu0 0.0
    %309 = vmatprep.subr.mxu0 0.0
    %310 = vmatpush1.msra.mxu0 0.0
    %311 = vmatprep.subr.mxu0 0.0
    %312 = vmatpush1.msra.mxu0 0.0
    %313 = vmatprep.subr.mxu0 0.0
    %314 = vmatpush1.msra.mxu0 0.0
    %315 = vmatprep.subr.mxu0 0.0
    %316 = vmatpush1.msra.mxu0 0.0
    %317 = vmatprep.subr.mxu0 0.0
    %318 = vmatpush1.msra.mxu0 0.0
    %319 = vmatprep.subr.mxu0 0.0
    %320 = vmatpush1.msra.mxu0 0.0
    %321 = vmatprep.subr.mxu0 0.0
    %322 = vmatpush1.msra.mxu0 0.0
    %323 = vmatprep.subr.mxu0 0.0
    %324 = vmatpush1.msra.mxu0 0.0
    %325 = vmatprep.subr.mxu0 0.0
    %326 = vmatpush1.msra.mxu0 0.0
    %327 = vmatprep.mubr.f32.mxu0 0.0
    %328 = vmatmul.mubr.f32.gmra.mrb[0].mxu0 %v181
    %v329 = vpop.f32.mrb[0].mxu0
    %v330 = vadd.f32 %v173, %v329
    %v331 = vpop.f32.mrb[0].mxu0
    %v332 = vadd.f32 %v173, %v331
    %333 = vdwg.mxu0
    %336 = vrot.lane.b32.xlu0 %v33, 1
    %v337 = vpop.permute.xlu0 %336
    %338 = vrot.lane.b32.xlu0 %v177, 1
    %v339 = vpop.permute.xlu0 %338
    %340 = vrot.lane.b32.xlu0 %v34, 1
    %v341 = vpop.permute.xlu0 %340
    %342 = vrot.lane.b32.xlu0 %v178, 1
    %v343 = vpop.permute.xlu0 %342
    %vm344 = vcmp.lt.s32.totalorder %v36, 1
    %v345 = vsel %vm344, %v341, %v343
    %v346 = vsel %vm344, %v339, %v341
    %v347 = vsel %vm344, %v337, %v339
    %v348 = vsel %vm344, %v343, %v337
    %v349 = vsel %vm140, 1, 0
    %v350 = vsel %vm141, 1, 0
    %v351 = vsel %vm142, 1, 0
    %v352 = vsel %vm143, 1, 0
    %vm353 = vcmp.eq.s32.totalorder %v349, 1
    %vm354 = vcmp.eq.s32.totalorder %v350, 1
    %vm355 = vcmp.eq.s32.totalorder %v351, 1
    %vm356 = vcmp.eq.s32.totalorder %v352, 1
    %v357 = vsel %vm353, %v348, -inf
    %v358 = vsel %vm354, %v347, -inf
    %v359 = vsel %vm355, %v346, -inf
    %v360 = vsel %vm356, %v345, -inf
    %v361 = vmax.f32 %v357, %v33
    %v362 = vmax.f32 %v358, %v177
    %v363 = vmax.f32 %v359, %v34
    %v364 = vmax.f32 %v360, %v178
    %365 = vrot.lane.b32.xlu0 %v33, 127
    %v366 = vpop.permute.xlu0 %365
    %367 = vrot.lane.b32.xlu0 %v177, 127
    %v368 = vpop.permute.xlu0 %367
    %369 = vrot.lane.b32.xlu0 %v34, 127
    %v370 = vpop.permute.xlu0 %369
    %371 = vrot.lane.b32.xlu0 %v178, 127
    %v372 = vpop.permute.xlu0 %371
    %vm373 = vcmp.lt.s32.totalorder %v36, 127
    %v374 = vsel %vm373, %v370, %v372
    %v375 = vsel %vm373, %v368, %v370
    %v376 = vsel %vm373, %v366, %v368
    %v377 = vsel %vm373, %v372, %v366
    %v378 = vsel %vm136, 1, 0
    %v379 = vsel %vm137, 1, 0
    %v380 = vsel %vm138, 1, 0
    %v381 = vsel %vm139, 1, 0
    %vm382 = vcmp.eq.s32.totalorder %v378, 1
    %vm383 = vcmp.eq.s32.totalorder %v379, 1
    %vm384 = vcmp.eq.s32.totalorder %v380, 1
    %vm385 = vcmp.eq.s32.totalorder %v381, 1
    %v386 = vsel %vm382, %v376, -inf
    %v387 = vsel %vm383, %v375, -inf
    %v388 = vsel %vm384, %v374, -inf
    %v389 = vsel %vm385, %v377, -inf
    %v390 = vmax.f32 %v361, %v386
    %v391 = vmax.f32 %v362, %v387
    %v392 = vmax.f32 %v363, %v388
    %v393 = vmax.f32 %v364, %v389
    %394 = vrot.lane.b32.xlu0 %v390, 16
    %v395 = vpop.permute.xlu0 %394
    %396 = vrot.lane.b32.xlu0 %v391, 16
    %v397 = vpop.permute.xlu0 %396
    %398 = vrot.lane.b32.xlu0 %v392, 16
    %v399 = vpop.permute.xlu0 %398
    %400 = vrot.lane.b32.xlu0 %v393, 16
    %v401 = vpop.permute.xlu0 %400
    %vm402 = vcmp.lt.s32.totalorder %v36, 16
    %v403 = vsel %vm402, %v399, %v401
    %v404 = vsel %vm402, %v397, %v399
    %v405 = vsel %vm402, %v395, %v397
    %v406 = vsel %vm402, %v401, %v395
    %v407 = vsel %vm148, 1, 0
    %v408 = vsel %vm149, 1, 0
    %v409 = vsel %vm150, 1, 0
    %v410 = vsel %vm151, 1, 0
    %vm411 = vcmp.eq.s32.totalorder %v407, 1
    %vm412 = vcmp.eq.s32.totalorder %v408, 1
    %vm413 = vcmp.eq.s32.totalorder %v409, 1
    %vm414 = vcmp.eq.s32.totalorder %v410, 1
    %v415 = vsel %vm411, %v406, -inf
    %v416 = vsel %vm412, %v405, -inf
    %v417 = vsel %vm413, %v404, -inf
    %v418 = vsel %vm414, %v403, -inf
    %v419 = vmax.f32 %v415, %v390
    %v420 = vmax.f32 %v416, %v391
    %v421 = vmax.f32 %v417, %v392
    %v422 = vmax.f32 %v418, %v393
    %423 = vrot.lane.b32.xlu0 %v390, 112
    %v424 = vpop.permute.xlu0 %423
    %425 = vrot.lane.b32.xlu0 %v391, 112
    %v426 = vpop.permute.xlu0 %425
    %427 = vrot.lane.b32.xlu0 %v392, 112
    %v428 = vpop.permute.xlu0 %427
    %429 = vrot.lane.b32.xlu0 %v393, 112
    %v430 = vpop.permute.xlu0 %429
    %vm431 = vcmp.lt.s32.totalorder %v36, 112
    %v432 = vsel %vm431, %v428, %v430
    %v433 = vsel %vm431, %v426, %v428
    %v434 = vsel %vm431, %v424, %v426
    %v435 = vsel %vm431, %v430, %v424
    %v436 = vsel %vm144, 1, 0
    %v437 = vsel %vm145, 1, 0
    %v438 = vsel %vm146, 1, 0
    %v439 = vsel %vm147, 1, 0
    %vm440 = vcmp.eq.s32.totalorder %v436, 1
    %vm441 = vcmp.eq.s32.totalorder %v437, 1
    %vm442 = vcmp.eq.s32.totalorder %v438, 1
    %vm443 = vcmp.eq.s32.totalorder %v439, 1
    %v444 = vsel %vm440, %v434, -inf
    %v445 = vsel %vm441, %v433, -inf
    %v446 = vsel %vm442, %v432, -inf
    %v447 = vsel %vm443, %v435, -inf
    %v448 = vmax.f32 %v419, %v444
    %v449 = vmax.f32 %v420, %v445
    %v450 = vmax.f32 %v421, %v446
    %v451 = vmax.f32 %v422, %v447
    %v456 = vrot.slane %v259, 4
    %v457 = vrot.slane %v261, 4
    %v458 = vrot.slane %v330, 4
    %v459 = vrot.slane %v332, 4
    %464 = vrot.lane.b32.xlu0 %v456, 2
    %v465 = vpop.permute.xlu0 %464
    %466 = vrot.lane.b32.xlu0 %v457, 2
    %v467 = vpop.permute.xlu0 %466
    %468 = vrot.lane.b32.xlu0 %v458, 2
    %v469 = vpop.permute.xlu0 %468
    %470 = vrot.lane.b32.xlu0 %v459, 2
    %v471 = vpop.permute.xlu0 %470
    %vm472 = vcmp.lt.s32.totalorder %v36, 2
    %v473 = vsel %vm472, %v469, %v471
    %v474 = vsel %vm472, %v467, %v469
    %v475 = vsel %vm472, %v465, %v467
    %v476 = vsel %vm472, %v471, %v465
    %v477 = vsel %vm156, 1, 0
    %v478 = vsel %vm157, 1, 0
    %v479 = vsel %vm158, 1, 0
    %v480 = vsel %vm159, 1, 0
    %vm481 = vcmp.eq.s32.totalorder %v477, 1
    %vm482 = vcmp.eq.s32.totalorder %v478, 1
    %vm483 = vcmp.eq.s32.totalorder %v479, 1
    %vm484 = vcmp.eq.s32.totalorder %v480, 1
    %v485 = vsel %vm481, %v476, 0.0
    %v486 = vsel %vm482, %v475, 0.0
    %v487 = vsel %vm483, %v474, 0.0
    %v488 = vsel %vm484, %v473, 0.0
    %489 = vrot.lane.b32.xlu0 %v456, 1
    %v490 = vpop.permute.xlu0 %489
    %491 = vrot.lane.b32.xlu0 %v457, 1
    %v492 = vpop.permute.xlu0 %491
    %493 = vrot.lane.b32.xlu0 %v458, 1
    %v494 = vpop.permute.xlu0 %493
    %495 = vrot.lane.b32.xlu0 %v459, 1
    %v496 = vpop.permute.xlu0 %495
    %v497 = vsel %vm344, %v494, %v496
    %v498 = vsel %vm344, %v492, %v494
    %v499 = vsel %vm344, %v490, %v492
    %v500 = vsel %vm344, %v496, %v490
    %v501 = vsel %vm353, %v500, 0.0
    %v502 = vsel %vm354, %v499, 0.0
    %v503 = vsel %vm355, %v498, 0.0
    %v504 = vsel %vm356, %v497, 0.0
    %505 = vrot.lane.b32.xlu0 %v456, 127
    %v506 = vpop.permute.xlu0 %505
    %507 = vrot.lane.b32.xlu0 %v457, 127
    %v508 = vpop.permute.xlu0 %507
    %509 = vrot.lane.b32.xlu0 %v458, 127
    %v510 = vpop.permute.xlu0 %509
    %511 = vrot.lane.b32.xlu0 %v459, 127
    %v512 = vpop.permute.xlu0 %511
    %v513 = vsel %vm373, %v510, %v512
    %v514 = vsel %vm373, %v508, %v510
    %v515 = vsel %vm373, %v506, %v508
    %v516 = vsel %vm373, %v512, %v506
    %v517 = vsel %vm382, %v515, 0.0
    %v518 = vsel %vm383, %v514, 0.0
    %v519 = vsel %vm384, %v513, 0.0
    %v520 = vsel %vm385, %v516, 0.0
    %521 = vrot.lane.b32.xlu0 %v456, 126
    %v522 = vpop.permute.xlu0 %521
    %523 = vrot.lane.b32.xlu0 %v457, 126
    %v524 = vpop.permute.xlu0 %523
    %525 = vrot.lane.b32.xlu0 %v458, 126
    %v526 = vpop.permute.xlu0 %525
    %527 = vrot.lane.b32.xlu0 %v459, 126
    %v528 = vpop.permute.xlu0 %527
    %vm529 = vcmp.lt.s32.totalorder %v36, 126
    %v530 = vsel %vm529, %v526, %v528
    %v531 = vsel %vm529, %v524, %v526
    %v532 = vsel %vm529, %v522, %v524
    %v533 = vsel %vm529, %v528, %v522
    %v534 = vsel %vm152, 1, 0
    %v535 = vsel %vm153, 1, 0
    %v536 = vsel %vm154, 1, 0
    %v537 = vsel %vm155, 1, 0
    %vm538 = vcmp.eq.s32.totalorder %v534, 1
    %vm539 = vcmp.eq.s32.totalorder %v535, 1
    %vm540 = vcmp.eq.s32.totalorder %v536, 1
    %vm541 = vcmp.eq.s32.totalorder %v537, 1
    %v542 = vsel %vm538, %v532, 0.0
    %v543 = vsel %vm539, %v531, 0.0
    %v544 = vsel %vm540, %v530, 0.0
    %v545 = vsel %vm541, %v533, 0.0
    %v550 = vrot.slane %v501, 4
    %v551 = vrot.slane %v502, 4
    %v552 = vrot.slane %v503, 4
    %v553 = vrot.slane %v504, 4
    %v562 = vrot.slane %v517, 4
    %v563 = vrot.slane %v518, 4
    %v564 = vrot.slane %v519, 4
    %v565 = vrot.slane %v520, 4
    %v570 = vsel %vm183, %v485, %v550
    %v571 = vsel %vm183, %v486, %v551
    %v572 = vsel %vm183, %v487, %v552
    %v573 = vsel %vm183, %v488, %v553
    %v574 = vsel %vm183, %v456, %v562
    %v575 = vsel %vm183, %v457, %v563
    %v576 = vsel %vm183, %v458, %v564
    %v577 = vsel %vm183, %v459, %v565
    %578 = vrot.lane.b32.xlu0 %v570, 32
    %v579 = vpop.permute.xlu0 %578
    %580 = vrot.lane.b32.xlu0 %v574, 32
    %v581 = vpop.permute.xlu0 %580
    %582 = vrot.lane.b32.xlu0 %v542, 32
    %v583 = vpop.permute.xlu0 %582
    %584 = vrot.lane.b32.xlu0 %v571, 32
    %v585 = vpop.permute.xlu0 %584
    %586 = vrot.lane.b32.xlu0 %v575, 32
    %v587 = vpop.permute.xlu0 %586
    %588 = vrot.lane.b32.xlu0 %v543, 32
    %v589 = vpop.permute.xlu0 %588
    %590 = vrot.lane.b32.xlu0 %v572, 32
    %v591 = vpop.permute.xlu0 %590
    %592 = vrot.lane.b32.xlu0 %v576, 32
    %v593 = vpop.permute.xlu0 %592
    %594 = vrot.lane.b32.xlu0 %v544, 32
    %v595 = vpop.permute.xlu0 %594
    %596 = vrot.lane.b32.xlu0 %v573, 32
    %v597 = vpop.permute.xlu0 %596
    %598 = vrot.lane.b32.xlu0 %v577, 32
    %v599 = vpop.permute.xlu0 %598
    %600 = vrot.lane.b32.xlu0 %v545, 32
    %v601 = vpop.permute.xlu0 %600
    %vm602 = vcmp.lt.s32.totalorder %v36, 32
    %v603 = vsel %vm602, %v591, %v597
    %v604 = vsel %vm602, %v593, %v599
    %v605 = vsel %vm602, %v595, %v601
    %v606 = vsel %vm602, %v585, %v591
    %v607 = vsel %vm602, %v587, %v593
    %v608 = vsel %vm602, %v589, %v595
    %v609 = vsel %vm602, %v579, %v585
    %v610 = vsel %vm602, %v581, %v587
    %v611 = vsel %vm602, %v583, %v589
    %v612 = vsel %vm602, %v597, %v579
    %v613 = vsel %vm602, %v599, %v581
    %v614 = vsel %vm602, %v601, %v583
    %v615 = vsel %vm164, 1, 0
    %v616 = vsel %vm165, 1, 0
    %v617 = vsel %vm166, 1, 0
    %v618 = vsel %vm167, 1, 0
    %vm619 = vcmp.eq.s32.totalorder %v615, 1
    %vm620 = vcmp.eq.s32.totalorder %v616, 1
    %vm621 = vcmp.eq.s32.totalorder %v617, 1
    %vm622 = vcmp.eq.s32.totalorder %v618, 1
    %v623 = vsel %vm619, %v612, 0.0
    %v624 = vsel %vm620, %v609, 0.0
    %v625 = vsel %vm621, %v606, 0.0
    %v626 = vsel %vm622, %v603, 0.0
    %v627 = vsel %vm619, %v613, 0.0
    %v628 = vsel %vm620, %v610, 0.0
    %v629 = vsel %vm621, %v607, 0.0
    %v630 = vsel %vm622, %v604, 0.0
    %v631 = vsel %vm619, %v614, 0.0
    %v632 = vsel %vm620, %v611, 0.0
    %v633 = vsel %vm621, %v608, 0.0
    %v634 = vsel %vm622, %v605, 0.0
    %635 = vrot.lane.b32.xlu0 %v570, 16
    %v636 = vpop.permute.xlu0 %635
    %637 = vrot.lane.b32.xlu0 %v574, 16
    %v638 = vpop.permute.xlu0 %637
    %639 = vrot.lane.b32.xlu0 %v542, 16
    %v640 = vpop.permute.xlu0 %639
    %641 = vrot.lane.b32.xlu0 %v571, 16
    %v642 = vpop.permute.xlu0 %641
    %643 = vrot.lane.b32.xlu0 %v575, 16
    %v644 = vpop.permute.xlu0 %643
    %645 = vrot.lane.b32.xlu0 %v543, 16
    %v646 = vpop.permute.xlu0 %645
    %647 = vrot.lane.b32.xlu0 %v572, 16
    %v648 = vpop.permute.xlu0 %647
    %649 = vrot.lane.b32.xlu0 %v576, 16
    %v650 = vpop.permute.xlu0 %649
    %651 = vrot.lane.b32.xlu0 %v544, 16
    %v652 = vpop.permute.xlu0 %651
    %653 = vrot.lane.b32.xlu0 %v573, 16
    %v654 = vpop.permute.xlu0 %653
    %655 = vrot.lane.b32.xlu0 %v577, 16
    %v656 = vpop.permute.xlu0 %655
    %657 = vrot.lane.b32.xlu0 %v545, 16
    %v658 = vpop.permute.xlu0 %657
    %v659 = vsel %vm402, %v648, %v654
    %v660 = vsel %vm402, %v650, %v656
    %v661 = vsel %vm402, %v652, %v658
    %v662 = vsel %vm402, %v642, %v648
    %v663 = vsel %vm402, %v644, %v650
    %v664 = vsel %vm402, %v646, %v652
    %v665 = vsel %vm402, %v636, %v642
    %v666 = vsel %vm402, %v638, %v644
    %v667 = vsel %vm402, %v640, %v646
    %v668 = vsel %vm402, %v654, %v636
    %v669 = vsel %vm402, %v656, %v638
    %v670 = vsel %vm402, %v658, %v640
    %v671 = vsel %vm411, %v668, 0.0
    %v672 = vsel %vm412, %v665, 0.0
    %v673 = vsel %vm413, %v662, 0.0
    %v674 = vsel %vm414, %v659, 0.0
    %v675 = vsel %vm411, %v669, 0.0
    %v676 = vsel %vm412, %v666, 0.0
    %v677 = vsel %vm413, %v663, 0.0
    %v678 = vsel %vm414, %v660, 0.0
    %v679 = vsel %vm411, %v670, 0.0
    %v680 = vsel %vm412, %v667, 0.0
    %v681 = vsel %vm413, %v664, 0.0
    %v682 = vsel %vm414, %v661, 0.0
    %683 = vrot.lane.b32.xlu0 %v570, 112
    %v684 = vpop.permute.xlu0 %683
    %685 = vrot.lane.b32.xlu0 %v574, 112
    %v686 = vpop.permute.xlu0 %685
    %687 = vrot.lane.b32.xlu0 %v542, 112
    %v688 = vpop.permute.xlu0 %687
    %689 = vrot.lane.b32.xlu0 %v571, 112
    %v690 = vpop.permute.xlu0 %689
    %691 = vrot.lane.b32.xlu0 %v575, 112
    %v692 = vpop.permute.xlu0 %691
    %693 = vrot.lane.b32.xlu0 %v543, 112
    %v694 = vpop.permute.xlu0 %693
    %695 = vrot.lane.b32.xlu0 %v572, 112
    %v696 = vpop.permute.xlu0 %695
    %697 = vrot.lane.b32.xlu0 %v576, 112
    %v698 = vpop.permute.xlu0 %697
    %699 = vrot.lane.b32.xlu0 %v544, 112
    %v700 = vpop.permute.xlu0 %699
    %701 = vrot.lane.b32.xlu0 %v573, 112
    %v702 = vpop.permute.xlu0 %701
    %703 = vrot.lane.b32.xlu0 %v577, 112
    %v704 = vpop.permute.xlu0 %703
    %705 = vrot.lane.b32.xlu0 %v545, 112
    %v706 = vpop.permute.xlu0 %705
    %v707 = vsel %vm431, %v696, %v702
    %v708 = vsel %vm431, %v698, %v704
    %v709 = vsel %vm431, %v700, %v706
    %v710 = vsel %vm431, %v690, %v696
    %v711 = vsel %vm431, %v692, %v698
    %v712 = vsel %vm431, %v694, %v700
    %v713 = vsel %vm431, %v684, %v690
    %v714 = vsel %vm431, %v686, %v692
    %v715 = vsel %vm431, %v688, %v694
    %v716 = vsel %vm431, %v702, %v684
    %v717 = vsel %vm431, %v704, %v686
    %v718 = vsel %vm431, %v706, %v688
    %v719 = vsel %vm440, %v713, 0.0
    %v720 = vsel %vm441, %v710, 0.0
    %v721 = vsel %vm442, %v707, 0.0
    %v722 = vsel %vm443, %v716, 0.0
    %v723 = vsel %vm440, %v714, 0.0
    %v724 = vsel %vm441, %v711, 0.0
    %v725 = vsel %vm442, %v708, 0.0
    %v726 = vsel %vm443, %v717, 0.0
    %v727 = vsel %vm440, %v715, 0.0
    %v728 = vsel %vm441, %v712, 0.0
    %v729 = vsel %vm442, %v709, 0.0
    %v730 = vsel %vm443, %v718, 0.0
    %731 = vrot.lane.b32.xlu0 %v570, 96
    %v732 = vpop.permute.xlu0 %731
    %733 = vrot.lane.b32.xlu0 %v574, 96
    %v734 = vpop.permute.xlu0 %733
    %735 = vrot.lane.b32.xlu0 %v542, 96
    %v736 = vpop.permute.xlu0 %735
    %737 = vrot.lane.b32.xlu0 %v571, 96
    %v738 = vpop.permute.xlu0 %737
    %739 = vrot.lane.b32.xlu0 %v575, 96
    %v740 = vpop.permute.xlu0 %739
    %741 = vrot.lane.b32.xlu0 %v543, 96
    %v742 = vpop.permute.xlu0 %741
    %743 = vrot.lane.b32.xlu0 %v572, 96
    %v744 = vpop.permute.xlu0 %743
    %745 = vrot.lane.b32.xlu0 %v576, 96
    %v746 = vpop.permute.xlu0 %745
    %747 = vrot.lane.b32.xlu0 %v544, 96
    %v748 = vpop.permute.xlu0 %747
    %749 = vrot.lane.b32.xlu0 %v573, 96
    %v750 = vpop.permute.xlu0 %749
    %751 = vrot.lane.b32.xlu0 %v577, 96
    %v752 = vpop.permute.xlu0 %751
    %753 = vrot.lane.b32.xlu0 %v545, 96
    %v754 = vpop.permute.xlu0 %753
    %vm755 = vcmp.lt.s32.totalorder %v36, 96
    %v756 = vsel %vm755, %v744, %v750
    %v757 = vsel %vm755, %v746, %v752
    %v758 = vsel %vm755, %v748, %v754
    %v759 = vsel %vm755, %v738, %v744
    %v760 = vsel %vm755, %v740, %v746
    %v761 = vsel %vm755, %v742, %v748
    %v762 = vsel %vm755, %v732, %v738
    %v763 = vsel %vm755, %v734, %v740
    %v764 = vsel %vm755, %v736, %v742
    %v765 = vsel %vm755, %v750, %v732
    %v766 = vsel %vm755, %v752, %v734
    %v767 = vsel %vm755, %v754, %v736
    %v768 = vsel %vm160, 1, 0
    %v769 = vsel %vm161, 1, 0
    %v770 = vsel %vm162, 1, 0
    %v771 = vsel %vm163, 1, 0
    %vm772 = vcmp.eq.s32.totalorder %v768, 1
    %vm773 = vcmp.eq.s32.totalorder %v769, 1
    %vm774 = vcmp.eq.s32.totalorder %v770, 1
    %vm775 = vcmp.eq.s32.totalorder %v771, 1
    %v776 = vsel %vm772, %v762, 0.0
    %v777 = vsel %vm773, %v759, 0.0
    %v778 = vsel %vm774, %v756, 0.0
    %v779 = vsel %vm775, %v765, 0.0
    %v780 = vsel %vm772, %v763, 0.0
    %v781 = vsel %vm773, %v760, 0.0
    %v782 = vsel %vm774, %v757, 0.0
    %v783 = vsel %vm775, %v766, 0.0
    %v784 = vsel %vm772, %v764, 0.0
    %v785 = vsel %vm773, %v761, 0.0
    %v786 = vsel %vm774, %v758, 0.0
    %v787 = vsel %vm775, %v767, 0.0
    %788 = vrot.lane.b32.xlu0 %v259, 1
    %v789 = vpop.permute.xlu0 %788
    %790 = vrot.lane.b32.xlu0 %v261, 1
    %v791 = vpop.permute.xlu0 %790
    %792 = vrot.lane.b32.xlu0 %v330, 1
    %v793 = vpop.permute.xlu0 %792
    %794 = vrot.lane.b32.xlu0 %v332, 1
    %v795 = vpop.permute.xlu0 %794
    %v796 = vsel %vm344, %v793, %v795
    %v797 = vsel %vm344, %v791, %v793
    %v798 = vsel %vm344, %v789, %v791
    %v799 = vsel %vm344, %v795, %v789
    %v800 = vsel %vm353, %v799, 0.0
    %v801 = vsel %vm354, %v798, 0.0
    %v802 = vsel %vm355, %v797, 0.0
    %v803 = vsel %vm356, %v796, 0.0
    %804 = vrot.lane.b32.xlu0 %v259, 127
    %v805 = vpop.permute.xlu0 %804
    %806 = vrot.lane.b32.xlu0 %v261, 127
    %v807 = vpop.permute.xlu0 %806
    %808 = vrot.lane.b32.xlu0 %v330, 127
    %v809 = vpop.permute.xlu0 %808
    %810 = vrot.lane.b32.xlu0 %v332, 127
    %v811 = vpop.permute.xlu0 %810
    %v812 = vsel %vm373, %v809, %v811
    %v813 = vsel %vm373, %v807, %v809
    %v814 = vsel %vm373, %v805, %v807
    %v815 = vsel %vm373, %v811, %v805
    %v816 = vsel %vm382, %v814, 0.0
    %v817 = vsel %vm383, %v813, 0.0
    %v818 = vsel %vm384, %v812, 0.0
    %v819 = vsel %vm385, %v815, 0.0
    %v820 = vsel %vm183, %v800, %v456
    %v821 = vsel %vm183, %v801, %v457
    %v822 = vsel %vm183, %v802, %v458
    %v823 = vsel %vm183, %v803, %v459
    %824 = vrot.lane.b32.xlu0 %v820, 16
    %v825 = vpop.permute.xlu0 %824
    %826 = vrot.lane.b32.xlu0 %v816, 16
    %v827 = vpop.permute.xlu0 %826
    %828 = vrot.lane.b32.xlu0 %v821, 16
    %v829 = vpop.permute.xlu0 %828
    %830 = vrot.lane.b32.xlu0 %v817, 16
    %v831 = vpop.permute.xlu0 %830
    %832 = vrot.lane.b32.xlu0 %v822, 16
    %v833 = vpop.permute.xlu0 %832
    %834 = vrot.lane.b32.xlu0 %v818, 16
    %v835 = vpop.permute.xlu0 %834
    %836 = vrot.lane.b32.xlu0 %v823, 16
    %v837 = vpop.permute.xlu0 %836
    %838 = vrot.lane.b32.xlu0 %v819, 16
    %v839 = vpop.permute.xlu0 %838
    %v840 = vsel %vm402, %v833, %v837
    %v841 = vsel %vm402, %v835, %v839
    %v842 = vsel %vm402, %v829, %v833
    %v843 = vsel %vm402, %v831, %v835
    %v844 = vsel %vm402, %v825, %v829
    %v845 = vsel %vm402, %v827, %v831
    %v846 = vsel %vm402, %v837, %v825
    %v847 = vsel %vm402, %v839, %v827
    %v848 = vsel %vm411, %v846, 0.0
    %v849 = vsel %vm412, %v844, 0.0
    %v850 = vsel %vm413, %v842, 0.0
    %v851 = vsel %vm414, %v840, 0.0
    %v852 = vsel %vm411, %v847, 0.0
    %v853 = vsel %vm412, %v845, 0.0
    %v854 = vsel %vm413, %v843, 0.0
    %v855 = vsel %vm414, %v841, 0.0
    %856 = vrot.lane.b32.xlu0 %v820, 112
    %v857 = vpop.permute.xlu0 %856
    %858 = vrot.lane.b32.xlu0 %v816, 112
    %v859 = vpop.permute.xlu0 %858
    %860 = vrot.lane.b32.xlu0 %v821, 112
    %v861 = vpop.permute.xlu0 %860
    %862 = vrot.lane.b32.xlu0 %v817, 112
    %v863 = vpop.permute.xlu0 %862
    %864 = vrot.lane.b32.xlu0 %v822, 112
    %v865 = vpop.permute.xlu0 %864
    %866 = vrot.lane.b32.xlu0 %v818, 112
    %v867 = vpop.permute.xlu0 %866
    %868 = vrot.lane.b32.xlu0 %v823, 112
    %v869 = vpop.permute.xlu0 %868
    %870 = vrot.lane.b32.xlu0 %v819, 112
    %v871 = vpop.permute.xlu0 %870
    %v872 = vsel %vm431, %v865, %v869
    %v873 = vsel %vm431, %v867, %v871
    %v874 = vsel %vm431, %v861, %v865
    %v875 = vsel %vm431, %v863, %v867
    %v876 = vsel %vm431, %v857, %v861
    %v877 = vsel %vm431, %v859, %v863
    %v878 = vsel %vm431, %v869, %v857
    %v879 = vsel %vm431, %v871, %v859
    %v880 = vsel %vm440, %v876, 0.0
    %v881 = vsel %vm441, %v874, 0.0
    %v882 = vsel %vm442, %v872, 0.0
    %v883 = vsel %vm443, %v878, 0.0
    %v884 = vsel %vm440, %v877, 0.0
    %v885 = vsel %vm441, %v875, 0.0
    %v886 = vsel %vm442, %v873, 0.0
    %v887 = vsel %vm443, %v879, 0.0
    %v892 = vrot.slane %v448, 4
    %v893 = vrot.slane %v449, 4
    %v894 = vrot.slane %v450, 4
    %v895 = vrot.slane %v451, 4
    %v912 = vrot.slane %v671, 4
    %v913 = vrot.slane %v672, 4
    %v914 = vrot.slane %v673, 4
    %v915 = vrot.slane %v674, 4
    %v916 = vrot.slane %v675, 4
    %v917 = vsel %vm183, %v912, %v916
    %v918 = vrot.slane %v676, 4
    %v919 = vsel %vm183, %v913, %v918
    %v920 = vrot.slane %v677, 4
    %v921 = vsel %vm183, %v914, %v920
    %v922 = vrot.slane %v678, 4
    %v923 = vsel %vm183, %v915, %v922
    %v924 = vrot.slane %v679, 4
    %v925 = vsel %vm183, %v916, %v924
    %v926 = vrot.slane %v680, 4
    %v927 = vsel %vm183, %v918, %v926
    %v928 = vrot.slane %v681, 4
    %v929 = vsel %vm183, %v920, %v928
    %v930 = vrot.slane %v682, 4
    %v931 = vsel %vm183, %v922, %v930
    %v956 = vrot.slane %v719, 4
    %v957 = vrot.slane %v720, 4
    %v958 = vrot.slane %v721, 4
    %v959 = vrot.slane %v722, 4
    %v960 = vrot.slane %v723, 4
    %v961 = vsel %vm183, %v956, %v960
    %v962 = vrot.slane %v724, 4
    %v963 = vsel %vm183, %v957, %v962
    %v964 = vrot.slane %v725, 4
    %v965 = vsel %vm183, %v958, %v964
    %v966 = vrot.slane %v726, 4
    %v967 = vsel %vm183, %v959, %v966
    %v968 = vrot.slane %v727, 4
    %v969 = vsel %vm183, %v960, %v968
    %v970 = vrot.slane %v728, 4
    %v971 = vsel %vm183, %v962, %v970
    %v972 = vrot.slane %v729, 4
    %v973 = vsel %vm183, %v964, %v972
    %v974 = vrot.slane %v730, 4
    %v975 = vsel %vm183, %v966, %v974
    %v996 = vrot.slane %v848, 4
    %v997 = vrot.slane %v849, 4
    %v998 = vrot.slane %v850, 4
    %v999 = vrot.slane %v851, 4
    %v1000 = vrot.slane %v852, 4
    %v1001 = vsel %vm183, %v996, %v1000
    %v1002 = vrot.slane %v853, 4
    %v1003 = vsel %vm183, %v997, %v1002
    %v1004 = vrot.slane %v854, 4
    %v1005 = vsel %vm183, %v998, %v1004
    %v1006 = vrot.slane %v855, 4
    %v1007 = vsel %vm183, %v999, %v1006
    %v1024 = vrot.slane %v880, 4
    %v1025 = vrot.slane %v881, 4
    %v1026 = vrot.slane %v882, 4
    %v1027 = vrot.slane %v883, 4
    %v1028 = vrot.slane %v884, 4
    %v1029 = vsel %vm183, %v1024, %v1028
    %v1030 = vrot.slane %v885, 4
    %v1031 = vsel %vm183, %v1025, %v1030
    %v1032 = vrot.slane %v886, 4
    %v1033 = vsel %vm183, %v1026, %v1032
    %v1034 = vrot.slane %v887, 4
    %v1035 = vsel %vm183, %v1027, %v1034
    %v1044 = vsel %vm183, %v33, %v892
    %v1045 = vsel %vm183, %v177, %v893
    %v1046 = vsel %vm183, %v34, %v894
    %v1047 = vsel %vm183, %v178, %v895
    %v1048 = vsel %vm183, %v631, %v912
    %v1049 = vsel %vm183, %v632, %v913
    %v1050 = vsel %vm183, %v633, %v914
    %v1051 = vsel %vm183, %v634, %v915
    %v1052 = vsel %vm183, %v542, %v956
    %v1053 = vsel %vm183, %v543, %v957
    %v1054 = vsel %vm183, %v544, %v958
    %v1055 = vsel %vm183, %v545, %v959
    %v1056 = vsel %vm183, %v784, %v996
    %v1057 = vsel %vm183, %v785, %v997
    %v1058 = vsel %vm183, %v786, %v998
    %v1059 = vsel %vm183, %v787, %v999
    %v1060 = vsel %vm183, %v816, %v1024
    %v1061 = vsel %vm183, %v817, %v1025
    %v1062 = vsel %vm183, %v818, %v1026
    %v1063 = vsel %vm183, %v819, %v1027
    %v1064 = vld [vmem:[%s3] sm:$0xff]
    %v1065 = vld [vmem:[%s3 + $0x8] sm:$0xff]
    %v1066 = vld [vmem:[%s3 + $0x10] sm:$0xff]
    %v1067 = vld [vmem:[%s3 + $0x18] sm:$0xff]
    %v1068 = vld [vmem:[%s3 + $0x20] sm:$0xff]
    %v1069 = vld [vmem:[%s3 + $0x28] sm:$0xff]
    %v1070 = vld [vmem:[%s3 + $0x30] sm:$0xff]
    %v1071 = vld [vmem:[%s3 + $0x38] sm:$0xff]
    %v1072 = vld [vmem:[%s4] sm:$0xff]
    %v1073 = vld [vmem:[%s4 + $0x8] sm:$0xff]
    %v1074 = vld [vmem:[%s4 + $0x10] sm:$0xff]
    %v1075 = vld [vmem:[%s4 + $0x18] sm:$0xff]
    %1077 = vset.pattern.permute.xlu0 0
    %1078 = vperm.xlu0 %1077, %v1072
    %v1079 = vpop.permute.xlu0 %1078
    %1082 = vset.pattern.permute.xlu0 0
    %1083 = vperm.xlu0 %1082, %v1073
    %v1084 = vpop.permute.xlu0 %1083
    %1087 = vset.pattern.permute.xlu0 0
    %1088 = vperm.xlu0 %1087, %v1074
    %v1089 = vpop.permute.xlu0 %1088
    %1092 = vset.pattern.permute.xlu0 0
    %1093 = vperm.xlu0 %1092, %v1075
    %v1094 = vpop.permute.xlu0 %1093
    %vm1096 = vcmask 130048
    %v1098 = vsel %vm1096, %v1065, 0
    %v1101 = vsel %vm1096, %v1067, 0
    %v1104 = vsel %vm1096, %v1069, 0
    %v1107 = vsel %vm1096, %v1071, 0
    %1109 = vmatprep.subr.mxu0 %v1045
    %1110 = vmatpush1.msra.mxu0 %v1044
    %1111 = vmatprep.subr.mxu0 %v624
    %1112 = vmatpush1.msra.mxu0 %v623
    %1113 = vmatprep.subr.mxu0 %v628
    %1114 = vmatpush1.msra.mxu0 %v627
    %1115 = vmatprep.subr.mxu0 %v1049
    %1116 = vmatpush1.msra.mxu0 %v1048
    %1117 = vmatprep.subr.mxu0 %v919
    %1118 = vmatpush1.msra.mxu0 %v917
    %1119 = vmatprep.subr.mxu0 %v927
    %1120 = vmatpush1.msra.mxu0 %v925
    %1121 = vmatprep.subr.mxu0 %v571
    %1122 = vmatpush1.msra.mxu0 %v570
    %1123 = vmatprep.subr.mxu0 %v575
    %1124 = vmatpush1.msra.mxu0 %v574
    %1125 = vmatprep.subr.mxu0 %v1053
    %1126 = vmatpush1.msra.mxu0 %v1052
    %1127 = vmatprep.subr.mxu0 %v963
    %1128 = vmatpush1.msra.mxu0 %v961
    %1129 = vmatprep.subr.mxu0 %v971
    %1130 = vmatpush1.msra.mxu0 %v969
    %1131 = vmatprep.subr.mxu0 %v777
    %1132 = vmatpush1.msra.mxu0 %v776
    %1133 = vmatprep.subr.mxu0 %v781
    %1134 = vmatpush1.msra.mxu0 %v780
    %1135 = vmatprep.subr.mxu0 %v1057
    %1136 = vmatpush1.msra.mxu0 %v1056
    %1137 = vmatprep.subr.mxu0 %v1003
    %1138 = vmatpush1.msra.mxu0 %v1001
    %1139 = vmatprep.subr.mxu0 %v821
    %1140 = vmatpush1.msra.mxu0 %v820
    %1141 = vmatprep.subr.mxu0 %v1061
    %1142 = vmatpush1.msra.mxu0 %v1060
    %1143 = vmatprep.subr.mxu0 %v1031
    %1144 = vmatpush1.msra.mxu0 %v1029
    %1145 = vmatprep.subr.mxu0 0.0
    %1146 = vmatpush1.msra.mxu0 0.0
    %1147 = vmatprep.subr.mxu0 0.0
    %1148 = vmatpush1.msra.mxu0 0.0
    %1149 = vmatprep.subr.mxu0 0.0
    %1150 = vmatpush1.msra.mxu0 0.0
    %1151 = vmatprep.subr.mxu0 0.0
    %1152 = vmatpush1.msra.mxu0 0.0
    %1153 = vmatprep.subr.mxu0 0.0
    %1154 = vmatpush1.msra.mxu0 0.0
    %1155 = vmatprep.subr.mxu0 0.0
    %1156 = vmatpush1.msra.mxu0 0.0
    %1157 = vmatprep.subr.mxu0 0.0
    %1158 = vmatpush1.msra.mxu0 0.0
    %1159 = vmatprep.subr.mxu0 0.0
    %1160 = vmatpush1.msra.mxu0 0.0
    %1161 = vmatprep.subr.mxu0 0.0
    %1162 = vmatpush1.msra.mxu0 0.0
    %1163 = vmatprep.subr.mxu0 0.0
    %1164 = vmatpush1.msra.mxu0 0.0
    %1165 = vmatprep.subr.mxu0 0.0
    %1166 = vmatpush1.msra.mxu0 0.0
    %1167 = vmatprep.subr.mxu0 0.0
    %1168 = vmatpush1.msra.mxu0 0.0
    %1169 = vmatprep.subr.mxu0 0.0
    %1170 = vmatpush1.msra.mxu0 0.0
    %1171 = vmatprep.subr.mxu0 0.0
    %1172 = vmatpush1.msra.mxu0 0.0
    %1173 = vmatprep.mubr.f32.mxu0 %v1098
    %1174 = vmatmul.mubr.f32.gmra.mrb[0].mxu0 %v1064
    %v1175 = vpop.f32.mrb[0].mxu0
    %v1176 = vadd.f32 %v1079, %v1175
    %v1177 = vpop.f32.mrb[0].mxu0
    %v1178 = vadd.f32 %v1079, %v1177
    %1179 = vmatprep.mubr.f32.mxu0 %v1101
    %1180 = vmatmul.mubr.f32.gmra.mrb[0].mxu0 %v1066
    %v1181 = vpop.f32.mrb[0].mxu0
    %v1182 = vadd.f32 %v1084, %v1181
    %v1183 = vpop.f32.mrb[0].mxu0
    %v1184 = vadd.f32 %v1084, %v1183
    %1185 = vmatprep.mubr.f32.mxu0 %v1104
    %1186 = vmatmul.mubr.f32.gmra.mrb[0].mxu0 %v1068
    %v1187 = vpop.f32.mrb[0].mxu0
    %v1188 = vadd.f32 %v1089, %v1187
    %v1189 = vpop.f32.mrb[0].mxu0
    %v1190 = vadd.f32 %v1089, %v1189
    %1191 = vmatprep.mubr.f32.mxu0 %v1107
    %1192 = vmatmul.mubr.f32.gmra.mrb[0].mxu0 %v1070
    %v1193 = vpop.f32.mrb[0].mxu0
    %v1194 = vadd.f32 %v1094, %v1193
    %v1195 = vpop.f32.mrb[0].mxu0
    %v1196 = vadd.f32 %v1094, %v1195
    %1197 = vdwg.mxu0
    %1198 = vmatprep.subr.mxu0 %v1047
    %1199 = vmatpush1.msra.mxu0 %v1046
    %1200 = vmatprep.subr.mxu0 %v626
    %1201 = vmatpush1.msra.mxu0 %v625
    %1202 = vmatprep.subr.mxu0 %v630
    %1203 = vmatpush1.msra.mxu0 %v629
    %1204 = vmatprep.subr.mxu0 %v1051
    %1205 = vmatpush1.msra.mxu0 %v1050
    %1206 = vmatprep.subr.mxu0 %v923
    %1207 = vmatpush1.msra.mxu0 %v921
    %1208 = vmatprep.subr.mxu0 %v931
    %1209 = vmatpush1.msra.mxu0 %v929
    %1210 = vmatprep.subr.mxu0 %v573
    %1211 = vmatpush1.msra.mxu0 %v572
    %1212 = vmatprep.subr.mxu0 %v577
    %1213 = vmatpush1.msra.mxu0 %v576
    %1214 = vmatprep.subr.mxu0 %v1055
    %1215 = vmatpush1.msra.mxu0 %v1054
    %1216 = vmatprep.subr.mxu0 %v967
    %1217 = vmatpush1.msra.mxu0 %v965
    %1218 = vmatprep.subr.mxu0 %v975
    %1219 = vmatpush1.msra.mxu0 %v973
    %1220 = vmatprep.subr.mxu0 %v779
    %1221 = vmatpush1.msra.mxu0 %v778
    %1222 = vmatprep.subr.mxu0 %v783
    %1223 = vmatpush1.msra.mxu0 %v782
    %1224 = vmatprep.subr.mxu0 %v1059
    %1225 = vmatpush1.msra.mxu0 %v1058
    %1226 = vmatprep.subr.mxu0 %v1007
    %1227 = vmatpush1.msra.mxu0 %v1005
    %1228 = vmatprep.subr.mxu0 %v823
    %1229 = vmatpush1.msra.mxu0 %v822
    %1230 = vmatprep.subr.mxu0 %v1063
    %1231 = vmatpush1.msra.mxu0 %v1062
    %1232 = vmatprep.subr.mxu0 %v1035
    %1233 = vmatpush1.msra.mxu0 %v1033
    %1234 = vmatprep.subr.mxu0 0.0
    %1235 = vmatpush1.msra.mxu0 0.0
    %1236 = vmatprep.subr.mxu0 0.0
    %1237 = vmatpush1.msra.mxu0 0.0
    %1238 = vmatprep.subr.mxu0 0.0
    %1239 = vmatpush1.msra.mxu0 0.0
    %1240 = vmatprep.subr.mxu0 0.0
    %1241 = vmatpush1.msra.mxu0 0.0
    %1242 = vmatprep.subr.mxu0 0.0
    %1243 = vmatpush1.msra.mxu0 0.0
    %1244 = vmatprep.subr.mxu0 0.0
    %1245 = vmatpush1.msra.mxu0 0.0
    %1246 = vmatprep.subr.mxu0 0.0
    %1247 = vmatpush1.msra.mxu0 0.0
    %1248 = vmatprep.subr.mxu0 0.0
    %1249 = vmatpush1.msra.mxu0 0.0
    %1250 = vmatprep.subr.mxu0 0.0
    %1251 = vmatpush1.msra.mxu0 0.0
    %1252 = vmatprep.subr.mxu0 0.0
    %1253 = vmatpush1.msra.mxu0 0.0
    %1254 = vmatprep.subr.mxu0 0.0
    %1255 = vmatpush1.msra.mxu0 0.0
    %1256 = vmatprep.subr.mxu0 0.0
    %1257 = vmatpush1.msra.mxu0 0.0
    %1258 = vmatprep.subr.mxu0 0.0
    %1259 = vmatpush1.msra.mxu0 0.0
    %1260 = vmatprep.subr.mxu0 0.0
    %1261 = vmatpush1.msra.mxu0 0.0
    %1262 = vmatprep.mubr.f32.mxu0 %v1098
    %1263 = vmatmul.mubr.f32.gmra.mrb[0].mxu0 %v1064
    %v1264 = vpop.f32.mrb[0].mxu0
    %v1265 = vadd.f32 %v1079, %v1264
    %v1266 = vpop.f32.mrb[0].mxu0
    %v1267 = vadd.f32 %v1079, %v1266
    %1268 = vmatprep.mubr.f32.mxu0 %v1101
    %1269 = vmatmul.mubr.f32.gmra.mrb[0].mxu0 %v1066
    %v1270 = vpop.f32.mrb[0].mxu0
    %v1271 = vadd.f32 %v1084, %v1270
    %v1272 = vpop.f32.mrb[0].mxu0
    %v1273 = vadd.f32 %v1084, %v1272
    %1274 = vmatprep.mubr.f32.mxu0 %v1104
    %1275 = vmatmul.mubr.f32.gmra.mrb[0].mxu0 %v1068
    %v1276 = vpop.f32.mrb[0].mxu0
    %v1277 = vadd.f32 %v1089, %v1276
    %v1278 = vpop.f32.mrb[0].mxu0
    %v1279 = vadd.f32 %v1089, %v1278
    %1280 = vmatprep.mubr.f32.mxu0 %v1107
    %1281 = vmatmul.mubr.f32.gmra.mrb[0].mxu0 %v1070
    %v1282 = vpop.f32.mrb[0].mxu0
    %v1283 = vadd.f32 %v1094, %v1282
    %v1284 = vpop.f32.mrb[0].mxu0
    %v1285 = vadd.f32 %v1094, %v1284
    %1286 = vdwg.mxu0
    %1287 = vst [vmem:[#allocation5] sm:$0xff] %v1176
    %1288 = vst [vmem:[#allocation5 + $0x8] sm:$0xff] %v1178
    %1289 = vst [vmem:[#allocation5 + $0x10] sm:$0xff] %v1265
    %1290 = vst [vmem:[#allocation5 + $0x18] sm:$0xff] %v1267
    %1291 = vst [vmem:[#allocation5 + $0x20] sm:$0xff] %v1182
    %1292 = vst [vmem:[#allocation5 + $0x28] sm:$0xff] %v1184
    %1293 = vst [vmem:[#allocation5 + $0x30] sm:$0xff] %v1271
    %1294 = vst [vmem:[#allocation5 + $0x38] sm:$0xff] %v1273
    %1295 = vst [vmem:[#allocation5 + $0x40] sm:$0xff] %v1188
    %1296 = vst [vmem:[#allocation5 + $0x48] sm:$0xff] %v1190
    %1297 = vst [vmem:[#allocation5 + $0x50] sm:$0xff] %v1277
    %1298 = vst [vmem:[#allocation5 + $0x58] sm:$0xff] %v1279
    %1299 = vst [vmem:[#allocation5 + $0x60] sm:$0xff] %v1194
    %1300 = vst [vmem:[#allocation5 + $0x68] sm:$0xff] %v1196
    %1301 = vst [vmem:[#allocation5 + $0x70] sm:$0xff] %v1283
    %1302 = vst [vmem:[#allocation5 + $0x78] sm:$0xff] %v1285
    // Predicated region
    $region26: #{tpu_custom_call.1} parent=1 // pred_check
      _
    $region27: #{tpu_custom_call.1} parent=1 // pred_check_branch
      %1304 = sbr.rel (0) target = $region29
    $region28: #{tpu_custom_call.1} parent=1 // pred_region
      %s1306 = ssub.s32 2048, 2048
      %1307 = vsyncadd [#allocation4], %s1306
      %s1308 = sshll.u32 [#allocation5], 4
      %s1309 = int_to_ptr.vmem [resolvable:$true] %s1308
      %1314 = dma.vmem_to_hbm [thread:$0]  %s1309, 2048, %s5, [#allocation4], 512, 512, 32
    $region29: #{tpu_custom_call.1} parent=1 // pred_fallthru
      _
    // Predicated region
    $region30: #{tpu_custom_call.1} parent=1 // pred_check
      _
    $region31: #{tpu_custom_call.1} parent=1 // pred_check_branch
      %1316 = sbr.rel (0) target = $region33
    $region32: #{tpu_custom_call.1} parent=1 // pred_region
      %1317 = dma.done [#allocation4], 2048
    $region33: #{tpu_custom_call.1} parent=1 // pred_fallthru
      _
    %1318 = vsyncpa [#allocation3], 1
    %1319 = vsyncpa [#allocation4], 1

</llo_original>
